<compile_context>
chip_gen: v5e
topology: v5e:2x2
jax: 0.10.0
libtpu: 0.0.40
codegen_flags: <defaults>
</compile_context>

<pallas_src>
import math

import numpy as np
import jax
import jax.numpy as jnp
from jax.experimental import pallas as pl
from jax.experimental.pallas import tpu as pltpu

EPS = 1e-6
NEG = -1000000000.0


# ----------------------------- helpers (traced inside kernels) -----------------------------

def _layer_norm(x, a, b):
    # Matches the PyTorch module exactly:
    #   a * (x - mean) / (std + eps) + b   with std unbiased (divide by n-1)
    d = x.shape[-1]
    mean = jnp.mean(x, axis=-1, keepdims=True)
    var = jnp.sum((x - mean) ** 2, axis=-1, keepdims=True) / (d - 1)
    std = jnp.sqrt(var)
    return a * (x - mean) / (std + EPS) + b


# ----------------------------- fused Pallas kernel -----------------------------

def _make_fused_kernel(head, d_k, layer_num, has_reshape, mm_dtype):
    D = head * d_k
    scale = 1.0 / math.sqrt(d_k)

    def _mm(a, b):
        # MXU matmul with f32 accumulation; operands in mm_dtype (f32 default, bf16 for real D).
        return jnp.dot(a.astype(mm_dtype), b.astype(mm_dtype),
                       preferred_element_type=jnp.float32)

    def kernel(x_ref, mask_ref, *refs):
        refs = list(refs)
        if has_reshape:
            wr_ref, br_ref = refs[0], refs[1]
            refs = refs[2:]
        (wqkv_ref, bqkv_ref, wo_ref, bo_ref, w5_ref, b5_ref, w4_ref, b4_ref,
         lna_ref, lnb_ref, o_ref, x_carry, ctx_slab) = refs

        l = pl.program_id(1)

        # ---- layer 0 only: load / project the input into the VMEM activation carry ----
        @pl.when(l == 0)
        def _():
            x0 = x_ref[0].astype(jnp.float32)            # (L, d_i)
            if has_reshape:
                x0 = _mm(x0, wr_ref[...]) + br_ref[...]  # d_i -> D
            x_carry[...] = x0

        x = x_carry[...]                                 # (L, D) f32, carried across layers
        # mask arrives as int8; widen then compare (no float mask, no > 0.5), hoisted out of
        # the head loop and reused for the -1e9 fill and the post-softmax zeroing.
        keep = mask_ref[0].astype(jnp.int32) > 0         # (L, L) bool

        ln_a = lna_ref[0]
        ln_b = lnb_ref[0]

        # ---- fused QKV: one matmul, one weight push ----
        qkv = _mm(x, wqkv_ref[0]) + bqkv_ref[0]          # (L, 3D) f32
        Q = qkv[:, 0 * D:1 * D] * scale                  # fold 1/sqrt(d_k) once per layer
        K = qkv[:, 1 * D:2 * D]
        V = qkv[:, 2 * D:3 * D]

        # ---- per-head attention; contexts written into an (L, D) slab ----
        for h in range(head):                            # static head loop
            s = slice(h * d_k, (h + 1) * d_k)
            S = jnp.einsum('qd,kd->qk', Q[:, s], K[:, s],
                           preferred_element_type=jnp.float32)
            S = jnp.where(keep, S, NEG)
            m = jnp.max(S, axis=-1, keepdims=True)
            e = jnp.exp(S - m)
            inv = pl.reciprocal(jnp.sum(e, axis=-1, keepdims=True), approx=True)
            att = jnp.where(keep, e * inv, 0.0)          # att_fixed = mask * softmax(S)
            ctx_slab[:, s] = _mm(att, V[:, s])

        # ---- single full-width (K = D) output projection ----
        out = _mm(ctx_slab[...], wo_ref[0]) + bo_ref[0]

        feed_1 = x + _layer_norm(out, ln_a, ln_b)
        t = _mm(feed_1, w5_ref[0]) + b5_ref[0]
        t = _mm(t, w4_ref[0]) + b4_ref[0]
        x_new = _layer_norm(feed_1 + _layer_norm(t, ln_a, ln_b), ln_a, ln_b)
        x_carry[...] = x_new

        @pl.when(l == layer_num - 1)
        def _():
            o_ref[0] = x_new

    return kernel


def transformer_model_pallas(x, mask_bool, params, *, matmul_dtype=jnp.float32):
    B, L, d_i = x.shape
    head = params['head']
    layers = params['layers']
    layer_num = len(layers)
    D = layers[0]['wq'].shape[0]
    d_k = D // head
    has_reshape = params['reshape'] is not None

    mask_i8 = mask_bool.astype(jnp.int8)                 # 4x less HBM traffic than f32

    # host-side (free): fuse QKV, stack per-layer weights on a leading layer axis,
    # ship matmul weights in matmul_dtype (bf16 halves weight traffic at real sizes).
    def stack(fn):
        return jnp.stack([fn(lp) for lp in layers], axis=0)

    wqkv = stack(lambda lp: jnp.concatenate([lp['wq'], lp['wk'], lp['wv']], 1)).astype(matmul_dtype)
    bqkv = stack(lambda lp: jnp.concatenate([lp['bq'], lp['bk'], lp['bv']], 1))
    wo = stack(lambda lp: lp['wo']).astype(matmul_dtype)
    bo = stack(lambda lp: lp['bo'])
    w5 = stack(lambda lp: lp['w5']).astype(matmul_dtype)
    b5 = stack(lambda lp: lp['b5'])
    w4 = stack(lambda lp: lp['w4']).astype(matmul_dtype)
    b4 = stack(lambda lp: lp['b4'])
    ln_a = stack(lambda lp: lp['ln_a'])
    ln_b = stack(lambda lp: lp['ln_b'])

    inputs = [x, mask_i8]
    in_specs = [
        pl.BlockSpec((1, L, d_i), lambda b, l: (b, 0, 0)),
        pl.BlockSpec((1, L, L), lambda b, l: (b, 0, 0)),
    ]
    if has_reshape:
        wr = params['reshape']['w'].astype(matmul_dtype)
        br = params['reshape']['b']
        inputs += [wr, br]
        in_specs += [
            pl.BlockSpec(wr.shape, lambda b, l: (0, 0)),
            pl.BlockSpec(br.shape, lambda b, l: (0, 0)),
        ]
    # per-layer weight blocks: only layer l's weights are resident; l+1 DMA overlaps l compute
    for arr in [wqkv, bqkv, wo, bo, w5, b5, w4, b4, ln_a, ln_b]:
        inputs.append(arr)
        in_specs.append(pl.BlockSpec((1,) + arr.shape[1:], lambda b, l: (l, 0, 0)))

    out_spec = pl.BlockSpec((1, L, D), lambda b, l: (b, 0, 0))

    scratch_shapes = [
        pltpu.VMEM((L, D), jnp.float32),   # activation carried across the layer axis
        pltpu.VMEM((L, D), jnp.float32),   # per-head context slab -> single output projection
    ]

    # explicit VMEM budget: double-buffered in/out blocks + scratch + headroom (v5e default is 16 MiB)
    def _nbytes(shape, dtype):
        return int(np.prod(shape)) * np.dtype(dtype).itemsize

    block_bytes = sum(_nbytes(spec.block_shape, a.dtype) for spec, a in zip(in_specs, inputs))
    block_bytes += _nbytes((1, L, D), jnp.float32)                       # output block
    vmem_limit = int(max(2 * block_bytes + 2 * _nbytes((L, D), jnp.float32) + (2 << 20),
                         8 << 20))

    kernel = _make_fused_kernel(head, d_k, layer_num, has_reshape, matmul_dtype)

    return pl.pallas_call(
        kernel,
        out_shape=jax.ShapeDtypeStruct((B, L, D), jnp.float32),
        grid=(B, layer_num),
        in_specs=in_specs,
        out_specs=out_spec,
        scratch_shapes=scratch_shapes,
        compiler_params=pltpu.CompilerParams(
            dimension_semantics=("parallel", "arbitrary"),
            vmem_limit_bytes=vmem_limit),
    )(*inputs)


# ----------------------------- pure-JAX reference (for verification) -----------------------------

def _ref_msa(x, mask_bool, p, head):
    B, L, D = x.shape
    d_k = D // head
    Q = (x @ p['wq'] + p['bq']).reshape(B, L, head, d_k).transpose(0, 2, 1, 3)
    K = (x @ p['wk'] + p['bk']).reshape(B, L, head, d_k).transpose(0, 2, 1, 3)
    V = (x @ p['wv'] + p['bv']).reshape(B, L, head, d_k).transpose(0, 2, 1, 3)
    S = jnp.einsum('bhqd,bhkd->bhqk', Q, K) / math.sqrt(d_k)
    me = mask_bool[:, None]                       # (B,1,L,L)
    S = jnp.where(me, S, NEG)
    att = jax.nn.softmax(S, axis=-1)
    att = me.astype(att.dtype) * att
    out = jnp.einsum('bhqk,bhkd->bhqd', att, V).transpose(0, 2, 1, 3).reshape(B, L, D)
    out = out @ p['wo'] + p['bo']
    feed_1 = x + _layer_norm(out, p['ln_a'], p['ln_b'])
    t = (feed_1 @ p['w5'] + p['b5']) @ p['w4'] + p['b4']
    return _layer_norm(feed_1 + _layer_norm(t, p['ln_a'], p['ln_b']),
                       p['ln_a'], p['ln_b'])


def _ref_model(x, mask_bool, params):
    if params['reshape'] is not None:
        x = x @ params['reshape']['w'] + params['reshape']['b']
    for lp in params['layers']:
        x = _ref_msa(x, mask_bool, lp, params['head'])
    return x


# ----------------------------- deterministic parameter init -----------------------------

def _init_linear(key, din, dout):
    kw, kb = jax.random.split(key)
    bound = 1.0 / math.sqrt(din)
    w = jax.random.uniform(kw, (din, dout), jnp.float32, -bound, bound)  # (in, out)
    b = jax.random.uniform(kb, (1, dout), jnp.float32, -bound, bound)
    return w, b


def init_params(key, d_i, d_o, head, layer_num):
    params = {'head': head, 'layers': []}
    key, k0 = jax.random.split(key)
    if d_i != d_o:
        w, b = _init_linear(k0, d_i, d_o)
        params['reshape'] = {'w': w, 'b': b}
    else:
        params['reshape'] = None
    for _ in range(layer_num):
        key, *ks = jax.random.split(key, 7)
        lp = {}
        for name, k in zip(['q', 'k', 'v', 'o', '5', '4'], ks):
            w, b = _init_linear(k, d_o, d_o)
            lp['w' + name], lp['b' + name] = w, b
        lp['ln_a'] = jnp.ones((1, d_o), jnp.float32)
        lp['ln_b'] = jnp.zeros((1, d_o), jnp.float32)
        params['layers'].append(lp)
    return params


# ----------------------------- main -----------------------------

if __name__ == "__main__":
    B, L, d_i, d_o, head, layer_num = 2, 8, 16, 32, 4, 2

    key = jax.random.PRNGKey(0)
    key, kx = jax.random.split(key)
    x = jax.random.normal(kx, (B, L, d_i), jnp.float32)
    # causal boolean mask, broadcast to all batch elements
    mask = jnp.broadcast_to(jnp.tril(jnp.ones((L, L), dtype=bool)), (B, L, L))

    params = init_params(key, d_i, d_o, head, layer_num)

    # f32-operand path: tight parity with the f32 reference (tolerance covers the EUP
    # approximate reciprocal on the softmax denominator).
    out = jax.block_until_ready(transformer_model_pallas(x, mask, params))
    ref = jax.block_until_ready(_ref_model(x, mask, params))
    np.testing.assert_allclose(np.asarray(out), np.asarray(ref), rtol=5e-3, atol=5e-3)

    # bf16-operand path (what real, non-toy D should use): f32 accumulation, f32 softmax /
    # LayerNorm; checked against the f32 reference at a loose tolerance.
    out_bf16 = jax.block_until_ready(
        transformer_model_pallas(x, mask, params, matmul_dtype=jnp.bfloat16))
    np.testing.assert_allclose(np.asarray(out_bf16), np.asarray(ref), rtol=1e-1, atol=1e-1)

    print("KERNEL_OK")
</pallas_src>

<mosaic_0001>
module attributes {stable_mosaic.version = 11 : i64} {
  func.func @kernel(%arg0: i32, %arg1: i32, %arg2: memref<1x8x16xf32, #tpu.memory_space<vmem>>, %arg3: memref<1x8x8xi8, #tpu.memory_space<vmem>>, %arg4: memref<16x32xf32, #tpu.memory_space<vmem>>, %arg5: memref<1x32xf32, #tpu.memory_space<vmem>>, %arg6: memref<1x32x96xf32, #tpu.memory_space<vmem>>, %arg7: memref<1x1x96xf32, #tpu.memory_space<vmem>>, %arg8: memref<1x32x32xf32, #tpu.memory_space<vmem>>, %arg9: memref<1x1x32xf32, #tpu.memory_space<vmem>>, %arg10: memref<1x32x32xf32, #tpu.memory_space<vmem>>, %arg11: memref<1x1x32xf32, #tpu.memory_space<vmem>>, %arg12: memref<1x32x32xf32, #tpu.memory_space<vmem>>, %arg13: memref<1x1x32xf32, #tpu.memory_space<vmem>>, %arg14: memref<1x1x32xf32, #tpu.memory_space<vmem>>, %arg15: memref<1x1x32xf32, #tpu.memory_space<vmem>>, %arg16: memref<1x8x32xf32, #tpu.memory_space<vmem>>, %arg17: memref<8x32xf32, #tpu.memory_space<vmem>>, %arg18: memref<8x32xf32, #tpu.memory_space<vmem>>) attributes {dimension_semantics = [#tpu.dimension_semantics<parallel>, #tpu.dimension_semantics<arbitrary>], iteration_bounds = array<i64: 2, 2>, scalar_prefetch = 0 : i64, scratch_operands = 2 : i64, tpu.core_type = #tpu.core_type<tc>, window_params = [{transform_indices = @transform_0, window_bounds = array<i64: 1, 8, 16>}, {transform_indices = @transform_1, window_bounds = array<i64: 1, 8, 8>}, {pipeline_mode = #tpu.pipeline_mode<synchronous>, transform_indices = @transform_2, window_bounds = array<i64: 16, 32>}, {pipeline_mode = #tpu.pipeline_mode<synchronous>, transform_indices = @transform_3, window_bounds = array<i64: 1, 32>}, {transform_indices = @transform_4, window_bounds = array<i64: 1, 32, 96>}, {transform_indices = @transform_5, window_bounds = array<i64: 1, 1, 96>}, {transform_indices = @transform_6, window_bounds = array<i64: 1, 32, 32>}, {transform_indices = @transform_7, window_bounds = array<i64: 1, 1, 32>}, {transform_indices = @transform_8, window_bounds = array<i64: 1, 32, 32>}, {transform_indices = @transform_9, window_bounds = array<i64: 1, 1, 32>}, {transform_indices = @transform_10, window_bounds = array<i64: 1, 32, 32>}, {transform_indices = @transform_11, window_bounds = array<i64: 1, 1, 32>}, {transform_indices = @transform_12, window_bounds = array<i64: 1, 1, 32>}, {transform_indices = @transform_13, window_bounds = array<i64: 1, 1, 32>}, {transform_indices = @transform_14, window_bounds = array<i64: 1, 8, 32>}]} {
    %c0_i32 = arith.constant 0 : i32
    %0 = arith.cmpi eq, %arg1, %c0_i32 : i32
    %1 = arith.extui %0 : i1 to i32
    %c0_i32_0 = arith.constant 0 : i32
    %2 = arith.cmpi ne, %1, %c0_i32_0 : i32
    scf.if %2 {
      %c0_89 = arith.constant 0 : index
      %c0_90 = arith.constant 0 : index
      %c0_91 = arith.constant 0 : index
      %199 = vector.load %arg2[%c0_89, %c0_90, %c0_91] : memref<1x8x16xf32, #tpu.memory_space<vmem>>, vector<1x8x16xf32>
      %200 = vector.shape_cast %199 : vector<1x8x16xf32> to vector<8x16xf32>
      %c0_92 = arith.constant 0 : index
      %c0_93 = arith.constant 0 : index
      %201 = vector.load %arg4[%c0_92, %c0_93] : memref<16x32xf32, #tpu.memory_space<vmem>>, vector<16x32xf32>
      %cst_94 = arith.constant dense<0.000000e+00> : vector<8x32xf32>
      %202 = tpu.matmul %200, %201, %cst_94 {dimension_numbers = #tpu.dot_dimension_numbers<[1], [0], [0], [1], [0, 0, 1, 1], [], []>} : vector<8x16xf32>, vector<16x32xf32>, vector<8x32xf32> -> vector<8x32xf32>
      %c0_95 = arith.constant 0 : index
      %c0_96 = arith.constant 0 : index
      %203 = vector.load %arg5[%c0_95, %c0_96] : memref<1x32xf32, #tpu.memory_space<vmem>>, vector<1x32xf32>
      %204 = vector.broadcast %203 : vector<1x32xf32> to vector<8x32xf32>
      %205 = arith.addf %202, %204 : vector<8x32xf32>
      %c0_97 = arith.constant 0 : index
      %c0_98 = arith.constant 0 : index
      %206 = vector.load %arg17[%c0_97, %c0_98] : memref<8x32xf32, #tpu.memory_space<vmem>>, vector<8x32xf32>
      tpu.vector_store %arg17[%c0_97, %c0_98], %205 {strides = array<i32>} : memref<8x32xf32, #tpu.memory_space<vmem>>, vector<8x32xf32>,
    } else {
    }
    %c0 = arith.constant 0 : index
    %c0_1 = arith.constant 0 : index
    %3 = vector.load %arg17[%c0, %c0_1] : memref<8x32xf32, #tpu.memory_space<vmem>>, vector<8x32xf32>
    %c0_2 = arith.constant 0 : index
    %c0_3 = arith.constant 0 : index
    %c0_4 = arith.constant 0 : index
    %4 = vector.load %arg3[%c0_2, %c0_3, %c0_4] : memref<1x8x8xi8, #tpu.memory_space<vmem>>, vector<1x8x8xi8>
    %5 = vector.shape_cast %4 : vector<1x8x8xi8> to vector<8x8xi8>
    %6 = arith.extsi %5 : vector<8x8xi8> to vector<8x8xi32>
    %c0_i32_5 = arith.constant 0 : i32
    %7 = vector.broadcast %c0_i32_5 : i32 to vector<8x8xi32>
    %8 = arith.cmpi sgt, %6, %7 : vector<8x8xi32>
    %c0_6 = arith.constant 0 : index
    %c0_7 = arith.constant 0 : index
    %c0_8 = arith.constant 0 : index
    %9 = vector.load %arg14[%c0_6, %c0_7, %c0_8] : memref<1x1x32xf32, #tpu.memory_space<vmem>>, vector<1x1x32xf32>
    %10 = vector.shape_cast %9 : vector<1x1x32xf32> to vector<1x32xf32>
    %c0_9 = arith.constant 0 : index
    %c0_10 = arith.constant 0 : index
    %c0_11 = arith.constant 0 : index
    %11 = vector.load %arg15[%c0_9, %c0_10, %c0_11] : memref<1x1x32xf32, #tpu.memory_space<vmem>>, vector<1x1x32xf32>
    %12 = vector.shape_cast %11 : vector<1x1x32xf32> to vector<1x32xf32>
    %c0_12 = arith.constant 0 : index
    %c0_13 = arith.constant 0 : index
    %c0_14 = arith.constant 0 : index
    %13 = vector.load %arg6[%c0_12, %c0_13, %c0_14] : memref<1x32x96xf32, #tpu.memory_space<vmem>>, vector<1x32x96xf32>
    %14 = vector.shape_cast %13 : vector<1x32x96xf32> to vector<32x96xf32>
    %cst = arith.constant dense<0.000000e+00> : vector<8x96xf32>
    %15 = tpu.matmul %3, %14, %cst {dimension_numbers = #tpu.dot_dimension_numbers<[1], [0], [0], [1], [0, 0, 1, 1], [], []>} : vector<8x32xf32>, vector<32x96xf32>, vector<8x96xf32> -> vector<8x96xf32>
    %c0_15 = arith.constant 0 : index
    %c0_16 = arith.constant 0 : index
    %c0_17 = arith.constant 0 : index
    %16 = vector.load %arg7[%c0_15, %c0_16, %c0_17] : memref<1x1x96xf32, #tpu.memory_space<vmem>>, vector<1x1x96xf32>
    %17 = vector.shape_cast %16 : vector<1x1x96xf32> to vector<1x96xf32>
    %18 = vector.broadcast %17 : vector<1x96xf32> to vector<8x96xf32>
    %19 = arith.addf %15, %18 : vector<8x96xf32>
    %20 = vector.extract_strided_slice %19 {offsets = [0, 0], sizes = [8, 32], strides = [1, 1]} : vector<8x96xf32> to vector<8x32xf32>
    %cst_18 = arith.constant 0.353553385 : f32
    %21 = vector.broadcast %cst_18 : f32 to vector<8x32xf32>
    %22 = arith.mulf %20, %21 : vector<8x32xf32>
    %23 = vector.extract_strided_slice %19 {offsets = [0, 32], sizes = [8, 32], strides = [1, 1]} : vector<8x96xf32> to vector<8x32xf32>
    %24 = vector.extract_strided_slice %19 {offsets = [0, 64], sizes = [8, 32], strides = [1, 1]} : vector<8x96xf32> to vector<8x32xf32>
    %25 = vector.extract_strided_slice %22 {offsets = [0, 0], sizes = [8, 8], strides = [1, 1]} : vector<8x32xf32> to vector<8x8xf32>
    %26 = vector.extract_strided_slice %23 {offsets = [0, 0], sizes = [8, 8], strides = [1, 1]} : vector<8x32xf32> to vector<8x8xf32>
    "tpu.trace_start"() <{level = 10 : i32, message = "qd,kd->qk"}> : () -> ()
    %cst_19 = arith.constant dense<0.000000e+00> : vector<8x8xf32>
    %27 = tpu.matmul %25, %26, %cst_19 {dimension_numbers = #tpu.dot_dimension_numbers<[1], [1], [0], [0], [0, 0, 1, 0], [], []>} : vector<8x8xf32>, vector<8x8xf32>, vector<8x8xf32> -> vector<8x8xf32>
    %cst_20 = arith.constant -1.000000e+09 : f32
    "tpu.trace_stop"() : () -> ()
    %28 = vector.broadcast %cst_20 : f32 to vector<8x8xf32>
    %29 = arith.select %8, %27, %28 : vector<8x8xi1>, vector<8x8xf32>
    %cst_21 = arith.constant dense<0xFF800000> : vector<8xf32>
    %30 = vector.multi_reduction <maximumf>, %29, %cst_21 [1] : vector<8x8xf32> to vector<8xf32>
    %31 = vector.shape_cast %30 : vector<8xf32> to vector<8x1xf32>
    %32 = vector.broadcast %31 : vector<8x1xf32> to vector<8x8xf32>
    %33 = arith.subf %29, %32 : vector<8x8xf32>
    %34 = math.exp %33 : vector<8x8xf32>
    %cst_22 = arith.constant dense<0.000000e+00> : vector<8xf32>
    %35 = vector.multi_reduction <add>, %34, %cst_22 [1] : vector<8x8xf32> to vector<8xf32>
    %36 = vector.shape_cast %35 : vector<8xf32> to vector<8x1xf32>
    %37 = tpu.reciprocal %36 {approx = true} : vector<8x1xf32> -> vector<8x1xf32>
    %38 = vector.broadcast %37 : vector<8x1xf32> to vector<8x8xf32>
    %39 = arith.mulf %34, %38 : vector<8x8xf32>
    %cst_23 = arith.constant 0.000000e+00 : f32
    %40 = vector.broadcast %cst_23 : f32 to vector<8x8xf32>
    %41 = arith.select %8, %39, %40 : vector<8x8xi1>, vector<8x8xf32>
    %42 = vector.extract_strided_slice %24 {offsets = [0, 0], sizes = [8, 8], strides = [1, 1]} : vector<8x32xf32> to vector<8x8xf32>
    %cst_24 = arith.constant dense<0.000000e+00> : vector<8x8xf32>
    %43 = tpu.matmul %41, %42, %cst_24 {dimension_numbers = #tpu.dot_dimension_numbers<[1], [0], [0], [1], [0, 0, 1, 1], [], []>} : vector<8x8xf32>, vector<8x8xf32>, vector<8x8xf32> -> vector<8x8xf32>
    %c0_25 = arith.constant 0 : index
    %c0_26 = arith.constant 0 : index
    %44 = vector.load %arg18[%c0_25, %c0_26] : memref<8x32xf32, #tpu.memory_space<vmem>>, vector<8x8xf32>
    tpu.vector_store %arg18[%c0_25, %c0_26], %43 {strides = array<i32>} : memref<8x32xf32, #tpu.memory_space<vmem>>, vector<8x8xf32>,
    %45 = vector.extract_strided_slice %22 {offsets = [0, 8], sizes = [8, 8], strides = [1, 1]} : vector<8x32xf32> to vector<8x8xf32>
    %46 = vector.extract_strided_slice %23 {offsets = [0, 8], sizes = [8, 8], strides = [1, 1]} : vector<8x32xf32> to vector<8x8xf32>
    "tpu.trace_start"() <{level = 10 : i32, message = "qd,kd->qk"}> : () -> ()
    %cst_27 = arith.constant dense<0.000000e+00> : vector<8x8xf32>
    %47 = tpu.matmul %45, %46, %cst_27 {dimension_numbers = #tpu.dot_dimension_numbers<[1], [1], [0], [0], [0, 0, 1, 0], [], []>} : vector<8x8xf32>, vector<8x8xf32>, vector<8x8xf32> -> vector<8x8xf32>
    %cst_28 = arith.constant -1.000000e+09 : f32
    "tpu.trace_stop"() : () -> ()
    %48 = vector.broadcast %cst_28 : f32 to vector<8x8xf32>
    %49 = arith.select %8, %47, %48 : vector<8x8xi1>, vector<8x8xf32>
    %cst_29 = arith.constant dense<0xFF800000> : vector<8xf32>
    %50 = vector.multi_reduction <maximumf>, %49, %cst_29 [1] : vector<8x8xf32> to vector<8xf32>
    %51 = vector.shape_cast %50 : vector<8xf32> to vector<8x1xf32>
    %52 = vector.broadcast %51 : vector<8x1xf32> to vector<8x8xf32>
    %53 = arith.subf %49, %52 : vector<8x8xf32>
    %54 = math.exp %53 : vector<8x8xf32>
    %cst_30 = arith.constant dense<0.000000e+00> : vector<8xf32>
    %55 = vector.multi_reduction <add>, %54, %cst_30 [1] : vector<8x8xf32> to vector<8xf32>
    %56 = vector.shape_cast %55 : vector<8xf32> to vector<8x1xf32>
    %57 = tpu.reciprocal %56 {approx = true} : vector<8x1xf32> -> vector<8x1xf32>
    %58 = vector.broadcast %57 : vector<8x1xf32> to vector<8x8xf32>
    %59 = arith.mulf %54, %58 : vector<8x8xf32>
    %cst_31 = arith.constant 0.000000e+00 : f32
    %60 = vector.broadcast %cst_31 : f32 to vector<8x8xf32>
    %61 = arith.select %8, %59, %60 : vector<8x8xi1>, vector<8x8xf32>
    %62 = vector.extract_strided_slice %24 {offsets = [0, 8], sizes = [8, 8], strides = [1, 1]} : vector<8x32xf32> to vector<8x8xf32>
    %cst_32 = arith.constant dense<0.000000e+00> : vector<8x8xf32>
    %63 = tpu.matmul %61, %62, %cst_32 {dimension_numbers = #tpu.dot_dimension_numbers<[1], [0], [0], [1], [0, 0, 1, 1], [], []>} : vector<8x8xf32>, vector<8x8xf32>, vector<8x8xf32> -> vector<8x8xf32>
    %c0_33 = arith.constant 0 : index
    %c8 = arith.constant 8 : index
    %64 = vector.load %arg18[%c0_33, %c8] : memref<8x32xf32, #tpu.memory_space<vmem>>, vector<8x8xf32>
    tpu.vector_store %arg18[%c0_33, %c8], %63 {strides = array<i32>} : memref<8x32xf32, #tpu.memory_space<vmem>>, vector<8x8xf32>,
    %65 = vector.extract_strided_slice %22 {offsets = [0, 16], sizes = [8, 8], strides = [1, 1]} : vector<8x32xf32> to vector<8x8xf32>
    %66 = vector.extract_strided_slice %23 {offsets = [0, 16], sizes = [8, 8], strides = [1, 1]} : vector<8x32xf32> to vector<8x8xf32>
    "tpu.trace_start"() <{level = 10 : i32, message = "qd,kd->qk"}> : () -> ()
    %cst_34 = arith.constant dense<0.000000e+00> : vector<8x8xf32>
    %67 = tpu.matmul %65, %66, %cst_34 {dimension_numbers = #tpu.dot_dimension_numbers<[1], [1], [0], [0], [0, 0, 1, 0], [], []>} : vector<8x8xf32>, vector<8x8xf32>, vector<8x8xf32> -> vector<8x8xf32>
    %cst_35 = arith.constant -1.000000e+09 : f32
    "tpu.trace_stop"() : () -> ()
    %68 = vector.broadcast %cst_35 : f32 to vector<8x8xf32>
    %69 = arith.select %8, %67, %68 : vector<8x8xi1>, vector<8x8xf32>
    %cst_36 = arith.constant dense<0xFF800000> : vector<8xf32>
    %70 = vector.multi_reduction <maximumf>, %69, %cst_36 [1] : vector<8x8xf32> to vector<8xf32>
    %71 = vector.shape_cast %70 : vector<8xf32> to vector<8x1xf32>
    %72 = vector.broadcast %71 : vector<8x1xf32> to vector<8x8xf32>
    %73 = arith.subf %69, %72 : vector<8x8xf32>
    %74 = math.exp %73 : vector<8x8xf32>
    %cst_37 = arith.constant dense<0.000000e+00> : vector<8xf32>
    %75 = vector.multi_reduction <add>, %74, %cst_37 [1] : vector<8x8xf32> to vector<8xf32>
    %76 = vector.shape_cast %75 : vector<8xf32> to vector<8x1xf32>
    %77 = tpu.reciprocal %76 {approx = true} : vector<8x1xf32> -> vector<8x1xf32>
    %78 = vector.broadcast %77 : vector<8x1xf32> to vector<8x8xf32>
    %79 = arith.mulf %74, %78 : vector<8x8xf32>
    %cst_38 = arith.constant 0.000000e+00 : f32
    %80 = vector.broadcast %cst_38 : f32 to vector<8x8xf32>
    %81 = arith.select %8, %79, %80 : vector<8x8xi1>, vector<8x8xf32>
    %82 = vector.extract_strided_slice %24 {offsets = [0, 16], sizes = [8, 8], strides = [1, 1]} : vector<8x32xf32> to vector<8x8xf32>
    %cst_39 = arith.constant dense<0.000000e+00> : vector<8x8xf32>
    %83 = tpu.matmul %81, %82, %cst_39 {dimension_numbers = #tpu.dot_dimension_numbers<[1], [0], [0], [1], [0, 0, 1, 1], [], []>} : vector<8x8xf32>, vector<8x8xf32>, vector<8x8xf32> -> vector<8x8xf32>
    %c0_40 = arith.constant 0 : index
    %c16 = arith.constant 16 : index
    %84 = vector.load %arg18[%c0_40, %c16] : memref<8x32xf32, #tpu.memory_space<vmem>>, vector<8x8xf32>
    tpu.vector_store %arg18[%c0_40, %c16], %83 {strides = array<i32>} : memref<8x32xf32, #tpu.memory_space<vmem>>, vector<8x8xf32>,
    %85 = vector.extract_strided_slice %22 {offsets = [0, 24], sizes = [8, 8], strides = [1, 1]} : vector<8x32xf32> to vector<8x8xf32>
    %86 = vector.extract_strided_slice %23 {offsets = [0, 24], sizes = [8, 8], strides = [1, 1]} : vector<8x32xf32> to vector<8x8xf32>
    "tpu.trace_start"() <{level = 10 : i32, message = "qd,kd->qk"}> : () -> ()
    %cst_41 = arith.constant dense<0.000000e+00> : vector<8x8xf32>
    %87 = tpu.matmul %85, %86, %cst_41 {dimension_numbers = #tpu.dot_dimension_numbers<[1], [1], [0], [0], [0, 0, 1, 0], [], []>} : vector<8x8xf32>, vector<8x8xf32>, vector<8x8xf32> -> vector<8x8xf32>
    %cst_42 = arith.constant -1.000000e+09 : f32
    "tpu.trace_stop"() : () -> ()
    %88 = vector.broadcast %cst_42 : f32 to vector<8x8xf32>
    %89 = arith.select %8, %87, %88 : vector<8x8xi1>, vector<8x8xf32>
    %cst_43 = arith.constant dense<0xFF800000> : vector<8xf32>
    %90 = vector.multi_reduction <maximumf>, %89, %cst_43 [1] : vector<8x8xf32> to vector<8xf32>
    %91 = vector.shape_cast %90 : vector<8xf32> to vector<8x1xf32>
    %92 = vector.broadcast %91 : vector<8x1xf32> to vector<8x8xf32>
    %93 = arith.subf %89, %92 : vector<8x8xf32>
    %94 = math.exp %93 : vector<8x8xf32>
    %cst_44 = arith.constant dense<0.000000e+00> : vector<8xf32>
    %95 = vector.multi_reduction <add>, %94, %cst_44 [1] : vector<8x8xf32> to vector<8xf32>
    %96 = vector.shape_cast %95 : vector<8xf32> to vector<8x1xf32>
    %97 = tpu.reciprocal %96 {approx = true} : vector<8x1xf32> -> vector<8x1xf32>
    %98 = vector.broadcast %97 : vector<8x1xf32> to vector<8x8xf32>
    %99 = arith.mulf %94, %98 : vector<8x8xf32>
    %cst_45 = arith.constant 0.000000e+00 : f32
    %100 = vector.broadcast %cst_45 : f32 to vector<8x8xf32>
    %101 = arith.select %8, %99, %100 : vector<8x8xi1>, vector<8x8xf32>
    %102 = vector.extract_strided_slice %24 {offsets = [0, 24], sizes = [8, 8], strides = [1, 1]} : vector<8x32xf32> to vector<8x8xf32>
    %cst_46 = arith.constant dense<0.000000e+00> : vector<8x8xf32>
    %103 = tpu.matmul %101, %102, %cst_46 {dimension_numbers = #tpu.dot_dimension_numbers<[1], [0], [0], [1], [0, 0, 1, 1], [], []>} : vector<8x8xf32>, vector<8x8xf32>, vector<8x8xf32> -> vector<8x8xf32>
    %c0_47 = arith.constant 0 : index
    %c24 = arith.constant 24 : index
    %104 = vector.load %arg18[%c0_47, %c24] : memref<8x32xf32, #tpu.memory_space<vmem>>, vector<8x8xf32>
    tpu.vector_store %arg18[%c0_47, %c24], %103 {strides = array<i32>} : memref<8x32xf32, #tpu.memory_space<vmem>>, vector<8x8xf32>,
    %c0_48 = arith.constant 0 : index
    %c0_49 = arith.constant 0 : index
    %105 = vector.load %arg18[%c0_48, %c0_49] : memref<8x32xf32, #tpu.memory_space<vmem>>, vector<8x32xf32>
    %c0_50 = arith.constant 0 : index
    %c0_51 = arith.constant 0 : index
    %c0_52 = arith.constant 0 : index
    %106 = vector.load %arg8[%c0_50, %c0_51, %c0_52] : memref<1x32x32xf32, #tpu.memory_space<vmem>>, vector<1x32x32xf32>
    %107 = vector.shape_cast %106 : vector<1x32x32xf32> to vector<32x32xf32>
    %cst_53 = arith.constant dense<0.000000e+00> : vector<8x32xf32>
    %108 = tpu.matmul %105, %107, %cst_53 {dimension_numbers = #tpu.dot_dimension_numbers<[1], [0], [0], [1], [0, 0, 1, 1], [], []>} : vector<8x32xf32>, vector<32x32xf32>, vector<8x32xf32> -> vector<8x32xf32>
    %c0_54 = arith.constant 0 : index
    %c0_55 = arith.constant 0 : index
    %c0_56 = arith.constant 0 : index
    %109 = vector.load %arg9[%c0_54, %c0_55, %c0_56] : memref<1x1x32xf32, #tpu.memory_space<vmem>>, vector<1x1x32xf32>
    %110 = vector.shape_cast %109 : vector<1x1x32xf32> to vector<1x32xf32>
    %111 = vector.broadcast %110 : vector<1x32xf32> to vector<8x32xf32>
    %112 = arith.addf %108, %111 : vector<8x32xf32>
    %cst_57 = arith.constant dense<0.000000e+00> : vector<8xf32>
    %113 = vector.multi_reduction <add>, %112, %cst_57 [1] : vector<8x32xf32> to vector<8xf32>
    %114 = vector.shape_cast %113 : vector<8xf32> to vector<8x1xf32>
    %cst_58 = arith.constant 3.200000e+01 : f32
    %115 = vector.broadcast %cst_58 : f32 to vector<8x1xf32>
    %116 = arith.divf %114, %115 : vector<8x1xf32>
    %117 = vector.broadcast %116 : vector<8x1xf32> to vector<8x32xf32>
    %118 = arith.subf %112, %117 : vector<8x32xf32>
    %119 = arith.mulf %118, %118 : vector<8x32xf32>
    %cst_59 = arith.constant dense<0.000000e+00> : vector<8xf32>
    %120 = vector.multi_reduction <add>, %119, %cst_59 [1] : vector<8x32xf32> to vector<8xf32>
    %121 = vector.shape_cast %120 : vector<8xf32> to vector<8x1xf32>
    %cst_60 = arith.constant 3.100000e+01 : f32
    %122 = vector.broadcast %cst_60 : f32 to vector<8x1xf32>
    %123 = arith.divf %121, %122 : vector<8x1xf32>
    %124 = math.sqrt %123 : vector<8x1xf32>
    %125 = vector.broadcast %116 : vector<8x1xf32> to vector<8x32xf32>
    %126 = arith.subf %112, %125 : vector<8x32xf32>
    %127 = vector.broadcast %10 : vector<1x32xf32> to vector<8x32xf32>
    %128 = arith.mulf %127, %126 : vector<8x32xf32>
    %cst_61 = arith.constant 9.99999997E-7 : f32
    %129 = vector.broadcast %cst_61 : f32 to vector<8x1xf32>
    %130 = arith.addf %124, %129 : vector<8x1xf32>
    %131 = vector.broadcast %130 : vector<8x1xf32> to vector<8x32xf32>
    %132 = arith.divf %128, %131 : vector<8x32xf32>
    %133 = vector.broadcast %12 : vector<1x32xf32> to vector<8x32xf32>
    %134 = arith.addf %132, %133 : vector<8x32xf32>
    %135 = arith.addf %3, %134 : vector<8x32xf32>
    %c0_62 = arith.constant 0 : index
    %c0_63 = arith.constant 0 : index
    %c0_64 = arith.constant 0 : index
    %136 = vector.load %arg10[%c0_62, %c0_63, %c0_64] : memref<1x32x32xf32, #tpu.memory_space<vmem>>, vector<1x32x32xf32>
    %137 = vector.shape_cast %136 : vector<1x32x32xf32> to vector<32x32xf32>
    %cst_65 = arith.constant dense<0.000000e+00> : vector<8x32xf32>
    %138 = tpu.matmul %135, %137, %cst_65 {dimension_numbers = #tpu.dot_dimension_numbers<[1], [0], [0], [1], [0, 0, 1, 1], [], []>} : vector<8x32xf32>, vector<32x32xf32>, vector<8x32xf32> -> vector<8x32xf32>
    %c0_66 = arith.constant 0 : index
    %c0_67 = arith.constant 0 : index
    %c0_68 = arith.constant 0 : index
    %139 = vector.load %arg11[%c0_66, %c0_67, %c0_68] : memref<1x1x32xf32, #tpu.memory_space<vmem>>, vector<1x1x32xf32>
    %140 = vector.shape_cast %139 : vector<1x1x32xf32> to vector<1x32xf32>
    %141 = vector.broadcast %140 : vector<1x32xf32> to vector<8x32xf32>
    %142 = arith.addf %138, %141 : vector<8x32xf32>
    %c0_69 = arith.constant 0 : index
    %c0_70 = arith.constant 0 : index
    %c0_71 = arith.constant 0 : index
    %143 = vector.load %arg12[%c0_69, %c0_70, %c0_71] : memref<1x32x32xf32, #tpu.memory_space<vmem>>, vector<1x32x32xf32>
    %144 = vector.shape_cast %143 : vector<1x32x32xf32> to vector<32x32xf32>
    %cst_72 = arith.constant dense<0.000000e+00> : vector<8x32xf32>
    %145 = tpu.matmul %142, %144, %cst_72 {dimension_numbers = #tpu.dot_dimension_numbers<[1], [0], [0], [1], [0, 0, 1, 1], [], []>} : vector<8x32xf32>, vector<32x32xf32>, vector<8x32xf32> -> vector<8x32xf32>
    %c0_73 = arith.constant 0 : index
    %c0_74 = arith.constant 0 : index
    %c0_75 = arith.constant 0 : index
    %146 = vector.load %arg13[%c0_73, %c0_74, %c0_75] : memref<1x1x32xf32, #tpu.memory_space<vmem>>, vector<1x1x32xf32>
    %147 = vector.shape_cast %146 : vector<1x1x32xf32> to vector<1x32xf32>
    %148 = vector.broadcast %147 : vector<1x32xf32> to vector<8x32xf32>
    %149 = arith.addf %145, %148 : vector<8x32xf32>
    %cst_76 = arith.constant dense<0.000000e+00> : vector<8xf32>
    %150 = vector.multi_reduction <add>, %149, %cst_76 [1] : vector<8x32xf32> to vector<8xf32>
    %151 = vector.shape_cast %150 : vector<8xf32> to vector<8x1xf32>
    %cst_77 = arith.constant 3.200000e+01 : f32
    %152 = vector.broadcast %cst_77 : f32 to vector<8x1xf32>
    %153 = arith.divf %151, %152 : vector<8x1xf32>
    %154 = vector.broadcast %153 : vector<8x1xf32> to vector<8x32xf32>
    %155 = arith.subf %149, %154 : vector<8x32xf32>
    %156 = arith.mulf %155, %155 : vector<8x32xf32>
    %cst_78 = arith.constant dense<0.000000e+00> : vector<8xf32>
    %157 = vector.multi_reduction <add>, %156, %cst_78 [1] : vector<8x32xf32> to vector<8xf32>
    %158 = vector.shape_cast %157 : vector<8xf32> to vector<8x1xf32>
    %cst_79 = arith.constant 3.100000e+01 : f32
    %159 = vector.broadcast %cst_79 : f32 to vector<8x1xf32>
    %160 = arith.divf %158, %159 : vector<8x1xf32>
    %161 = math.sqrt %160 : vector<8x1xf32>
    %162 = vector.broadcast %153 : vector<8x1xf32> to vector<8x32xf32>
    %163 = arith.subf %149, %162 : vector<8x32xf32>
    %164 = vector.broadcast %10 : vector<1x32xf32> to vector<8x32xf32>
    %165 = arith.mulf %164, %163 : vector<8x32xf32>
    %cst_80 = arith.constant 9.99999997E-7 : f32
    %166 = vector.broadcast %cst_80 : f32 to vector<8x1xf32>
    %167 = arith.addf %161, %166 : vector<8x1xf32>
    %168 = vector.broadcast %167 : vector<8x1xf32> to vector<8x32xf32>
    %169 = arith.divf %165, %168 : vector<8x32xf32>
    %170 = vector.broadcast %12 : vector<1x32xf32> to vector<8x32xf32>
    %171 = arith.addf %169, %170 : vector<8x32xf32>
    %172 = arith.addf %135, %171 : vector<8x32xf32>
    %cst_81 = arith.constant dense<0.000000e+00> : vector<8xf32>
    %173 = vector.multi_reduction <add>, %172, %cst_81 [1] : vector<8x32xf32> to vector<8xf32>
    %174 = vector.shape_cast %173 : vector<8xf32> to vector<8x1xf32>
    %cst_82 = arith.constant 3.200000e+01 : f32
    %175 = vector.broadcast %cst_82 : f32 to vector<8x1xf32>
    %176 = arith.divf %174, %175 : vector<8x1xf32>
    %177 = vector.broadcast %176 : vector<8x1xf32> to vector<8x32xf32>
    %178 = arith.subf %172, %177 : vector<8x32xf32>
    %179 = arith.mulf %178, %178 : vector<8x32xf32>
    %cst_83 = arith.constant dense<0.000000e+00> : vector<8xf32>
    %180 = vector.multi_reduction <add>, %179, %cst_83 [1] : vector<8x32xf32> to vector<8xf32>
    %181 = vector.shape_cast %180 : vector<8xf32> to vector<8x1xf32>
    %cst_84 = arith.constant 3.100000e+01 : f32
    %182 = vector.broadcast %cst_84 : f32 to vector<8x1xf32>
    %183 = arith.divf %181, %182 : vector<8x1xf32>
    %184 = math.sqrt %183 : vector<8x1xf32>
    %185 = vector.broadcast %176 : vector<8x1xf32> to vector<8x32xf32>
    %186 = arith.subf %172, %185 : vector<8x32xf32>
    %187 = vector.broadcast %10 : vector<1x32xf32> to vector<8x32xf32>
    %188 = arith.mulf %187, %186 : vector<8x32xf32>
    %cst_85 = arith.constant 9.99999997E-7 : f32
    %189 = vector.broadcast %cst_85 : f32 to vector<8x1xf32>
    %190 = arith.addf %184, %189 : vector<8x1xf32>
    %191 = vector.broadcast %190 : vector<8x1xf32> to vector<8x32xf32>
    %192 = arith.divf %188, %191 : vector<8x32xf32>
    %193 = vector.broadcast %12 : vector<1x32xf32> to vector<8x32xf32>
    %194 = arith.addf %192, %193 : vector<8x32xf32>
    %c0_86 = arith.constant 0 : index
    %c0_87 = arith.constant 0 : index
    %195 = vector.load %arg17[%c0_86, %c0_87] : memref<8x32xf32, #tpu.memory_space<vmem>>, vector<8x32xf32>
    tpu.vector_store %arg17[%c0_86, %c0_87], %194 {strides = array<i32>} : memref<8x32xf32, #tpu.memory_space<vmem>>, vector<8x32xf32>,
    %c1_i32 = arith.constant 1 : i32
    %196 = arith.cmpi eq, %arg1, %c1_i32 : i32
    %197 = arith.extui %196 : i1 to i32
    %c0_i32_88 = arith.constant 0 : i32
    %198 = arith.cmpi ne, %197, %c0_i32_88 : i32
    scf.if %198 {
      %c0_89 = arith.constant 0 : index
      %c0_90 = arith.constant 0 : index
      %c0_91 = arith.constant 0 : index
      %199 = vector.load %arg16[%c0_89, %c0_90, %c0_91] : memref<1x8x32xf32, #tpu.memory_space<vmem>>, vector<1x8x32xf32>
      %200 = vector.shape_cast %199 : vector<1x8x32xf32> to vector<8x32xf32>
      %201 = vector.shape_cast %194 : vector<8x32xf32> to vector<1x8x32xf32>
      tpu.vector_store %arg16[%c0_89, %c0_90, %c0_91], %201 {strides = array<i32>} : memref<1x8x32xf32, #tpu.memory_space<vmem>>, vector<1x8x32xf32>,
    } else {
    }
    return
  }
  func.func @transform_0(%arg0: i32, %arg1: i32) -> (i32, i32, i32) {
    %c0_i32 = arith.constant 0 : i32
    %c0_i32_0 = arith.constant 0 : i32
    %c0_i32_1 = arith.constant 0 : i32
    return %arg0, %c0_i32, %c0_i32_0 : i32, i32, i32
  }
  func.func @transform_1(%arg0: i32, %arg1: i32) -> (i32, i32, i32) {
    %c0_i32 = arith.constant 0 : i32
    %c0_i32_0 = arith.constant 0 : i32
    %c0_i32_1 = arith.constant 0 : i32
    return %arg0, %c0_i32, %c0_i32_0 : i32, i32, i32
  }
  func.func @transform_2(%arg0: i32, %arg1: i32) -> (i32, i32) {
    %c0_i32 = arith.constant 0 : i32
    %c0_i32_0 = arith.constant 0 : i32
    %c0_i32_1 = arith.constant 0 : i32
    return %c0_i32, %c0_i32_0 : i32, i32
  }
  func.func @transform_3(%arg0: i32, %arg1: i32) -> (i32, i32) {
    %c0_i32 = arith.constant 0 : i32
    %c0_i32_0 = arith.constant 0 : i32
    %c0_i32_1 = arith.constant 0 : i32
    return %c0_i32, %c0_i32_0 : i32, i32
  }
  func.func @transform_4(%arg0: i32, %arg1: i32) -> (i32, i32, i32) {
    %c0_i32 = arith.constant 0 : i32
    %c0_i32_0 = arith.constant 0 : i32
    %c0_i32_1 = arith.constant 0 : i32
    return %arg1, %c0_i32, %c0_i32_0 : i32, i32, i32
  }
  func.func @transform_5(%arg0: i32, %arg1: i32) -> (i32, i32, i32) {
    %c0_i32 = arith.constant 0 : i32
    %c0_i32_0 = arith.constant 0 : i32
    %c0_i32_1 = arith.constant 0 : i32
    return %arg1, %c0_i32, %c0_i32_0 : i32, i32, i32
  }
  func.func @transform_6(%arg0: i32, %arg1: i32) -> (i32, i32, i32) {
    %c0_i32 = arith.constant 0 : i32
    %c0_i32_0 = arith.constant 0 : i32
    %c0_i32_1 = arith.constant 0 : i32
    return %arg1, %c0_i32, %c0_i32_0 : i32, i32, i32
  }
  func.func @transform_7(%arg0: i32, %arg1: i32) -> (i32, i32, i32) {
    %c0_i32 = arith.constant 0 : i32
    %c0_i32_0 = arith.constant 0 : i32
    %c0_i32_1 = arith.constant 0 : i32
    return %arg1, %c0_i32, %c0_i32_0 : i32, i32, i32
  }
  func.func @transform_8(%arg0: i32, %arg1: i32) -> (i32, i32, i32) {
    %c0_i32 = arith.constant 0 : i32
    %c0_i32_0 = arith.constant 0 : i32
    %c0_i32_1 = arith.constant 0 : i32
    return %arg1, %c0_i32, %c0_i32_0 : i32, i32, i32
  }
  func.func @transform_9(%arg0: i32, %arg1: i32) -> (i32, i32, i32) {
    %c0_i32 = arith.constant 0 : i32
    %c0_i32_0 = arith.constant 0 : i32
    %c0_i32_1 = arith.constant 0 : i32
    return %arg1, %c0_i32, %c0_i32_0 : i32, i32, i32
  }
  func.func @transform_10(%arg0: i32, %arg1: i32) -> (i32, i32, i32) {
    %c0_i32 = arith.constant 0 : i32
    %c0_i32_0 = arith.constant 0 : i32
    %c0_i32_1 = arith.constant 0 : i32
    return %arg1, %c0_i32, %c0_i32_0 : i32, i32, i32
  }
  func.func @transform_11(%arg0: i32, %arg1: i32) -> (i32, i32, i32) {
    %c0_i32 = arith.constant 0 : i32
    %c0_i32_0 = arith.constant 0 : i32
    %c0_i32_1 = arith.constant 0 : i32
    return %arg1, %c0_i32, %c0_i32_0 : i32, i32, i32
  }
  func.func @transform_12(%arg0: i32, %arg1: i32) -> (i32, i32, i32) {
    %c0_i32 = arith.constant 0 : i32
    %c0_i32_0 = arith.constant 0 : i32
    %c0_i32_1 = arith.constant 0 : i32
    return %arg1, %c0_i32, %c0_i32_0 : i32, i32, i32
  }
  func.func @transform_13(%arg0: i32, %arg1: i32) -> (i32, i32, i32) {
    %c0_i32 = arith.constant 0 : i32
    %c0_i32_0 = arith.constant 0 : i32
    %c0_i32_1 = arith.constant 0 : i32
    return %arg1, %c0_i32, %c0_i32_0 : i32, i32, i32
  }
  func.func @transform_14(%arg0: i32, %arg1: i32) -> (i32, i32, i32) {
    %c0_i32 = arith.constant 0 : i32
    %c0_i32_0 = arith.constant 0 : i32
    %c0_i32_1 = arith.constant 0 : i32
    return %arg0, %c0_i32, %c0_i32_0 : i32, i32, i32
  }
}

</mosaic_0001>

<llo_original>
// kernel: tpu_custom_call.1
$region0: #{tpu_custom_call.1}
  #allocation0 [shape = 'u32[]', space=smem, size = 0x4, offset = 0x4, fixed_abs, tag = 'smem constant byte address 0x4 - core index']
  #allocation1 [shape = 'u32[72,128]{1,0:T(1,128)}', space=vmem, size = 0x9000, scoped, tag = 'internal scratch']
  #allocation2 [shape = 'f32[8,32]{1,0:T(8,128)}', space=vmem, size = 0x1000, scoped, tag = 'scratch operand']
  #allocation3 [shape = 'f32[8,32]{1,0:T(8,128)}', space=vmem, size = 0x1000, scoped, tag = 'scratch operand']
  %s0 = inlined_call_operand.hbm [shape: f32[2,8,16], index: 0, kind: input, shape index: {}]
  %s1 = inlined_call_operand.hbm [shape: s8[2,8,8], index: 1, kind: input, shape index: {}]
  %s2 = inlined_call_operand.hbm [shape: f32[16,32], index: 2, kind: input, shape index: {}]
  %s3 = inlined_call_operand.hbm [shape: f32[1,32], index: 3, kind: input, shape index: {}]
  %s4 = inlined_call_operand.hbm [shape: f32[2,32,96], index: 4, kind: input, shape index: {}]
  %s5 = inlined_call_operand.vmem [shape: f32[2,1,96], index: 5, kind: input, shape index: {}]
  %s6 = inlined_call_operand.hbm [shape: f32[2,32,32], index: 6, kind: input, shape index: {}]
  %s7 = inlined_call_operand.vmem [shape: f32[2,1,32], index: 7, kind: input, shape index: {}]
  %s8 = inlined_call_operand.hbm [shape: f32[2,32,32], index: 8, kind: input, shape index: {}]
  %s9 = inlined_call_operand.vmem [shape: f32[2,1,32], index: 9, kind: input, shape index: {}]
  %s10 = inlined_call_operand.hbm [shape: f32[2,32,32], index: 10, kind: input, shape index: {}]
  %s11 = inlined_call_operand.vmem [shape: f32[2,1,32], index: 11, kind: input, shape index: {}]
  %s12 = inlined_call_operand.vmem [shape: f32[2,1,32], index: 12, kind: input, shape index: {}]
  %s13 = inlined_call_operand.vmem [shape: f32[2,1,32], index: 13, kind: input, shape index: {}]
  %s14 = inlined_call_operand.hbm [shape: f32[2,8,32], index: 14, kind: output, shape index: {}]
  %s15 = sld [smem:[#allocation0]]
  $region129: #{tpu_custom_call.1} parent=0
    _
  %s17 = ssub.s32 1, %s15
  %s18 = scalar_select 0, %s17, %s15
  $region1: #{tpu_custom_call.1} parent=0
    #allocation4 [shape = 'u8[8192]{0}', space=vmem, size = 0x2000, scoped, tag = 'input window, operand 0']
    #allocation5 [shape = 's32[2]{0}', space=sflag, size = 0x8, scoped, tag = 'scoped memory for tpu_custom_call.1']
    #allocation6 [shape = 's32[2]{0}', space=sflag, size = 0x8, scoped, tag = 'scoped memory for tpu_custom_call.1']
    #allocation7 [shape = 'u8[2048]{0}', space=vmem, size = 0x800, scoped, tag = 'input window, operand 1']
    #allocation8 [shape = 's32[2]{0}', space=sflag, size = 0x8, scoped, tag = 'scoped memory for tpu_custom_call.1']
    #allocation9 [shape = 'u8[8192]{0}', space=vmem, size = 0x2000, scoped, tag = 'input window, operand 2, single buffered']
    #allocation10 [shape = 'u8[512]{0}', space=vmem, size = 0x400, scoped, tag = 'input window, operand 3, single buffered']
    #allocation11 [shape = 's32[1]{0}', space=sflag, size = 0x4, scoped, tag = 'scoped memory for tpu_custom_call.1']
    #allocation12 [shape = 'u8[32768]{0}', space=vmem, size = 0x8000, scoped, tag = 'input window, operand 4']
    #allocation13 [shape = 'u8[32768]{0}', space=vmem, size = 0x8000, scoped, tag = 'input window, operand 6']
    #allocation14 [shape = 'u8[32768]{0}', space=vmem, size = 0x8000, scoped, tag = 'input window, operand 8']
    #allocation15 [shape = 'u8[32768]{0}', space=vmem, size = 0x8000, scoped, tag = 'input window, operand 10']
    #allocation16 [shape = 'u8[8192]{0}', space=vmem, size = 0x2000, scoped, tag = 'output window, operand 0']
    %19 = vsyncpa [#allocation5], 0
    %s20 = scalar_lea.sflag [#allocation5], 1
    %21 = vsyncpa %s20, 0
    %22 = vsyncpa [#allocation8], 0
    %s23 = scalar_lea.sflag [#allocation8], 1
    %24 = vsyncpa %s23, 0
    %25 = vsyncpa [#allocation11], 0
    %26 = vsyncpa [#allocation6], 0
    %s27 = scalar_lea.sflag [#allocation6], 1
    %28 = vsyncpa %s27, 0
    loop: start=0, step=1, limit=6
    $region2: #{tpu_custom_call.1} parent=1 // loop_pre_header
      _
    $region3: #{tpu_custom_call.1} parent=1 // loop_header
      %s30 = sphi 0, %s34
      %p31 = scmp.ge.s32.totalorder %s30, 6
      %s37 = sphi 0, %s49
      %s38 = sphi 0, %s45
      %s39 = sphi 0, %s37
      %s40 = sphi 0, %s38
      %s41 = sphi 0, %s39
      %s42 = sphi 0, %s40
      %s52 = sphi 0, %s54
      %s55 = sphi 0, %s52
      %s56 = sphi 0, %s55
      %s72 = sphi 0, %s56
      %s78 = sphi 0, %s80
      %s81 = sphi 0, %s78
      %s82 = sphi 0, %s81
      %s98 = sphi 0, %s82
      %s102 = sphi 0, %s102
      %s104 = sphi 0, %s102
      %s105 = sphi 0, %s104
      %s119 = sphi 0, %s105
      %s123 = sphi 0, %s123
      %s125 = sphi 0, %s123
      %s126 = sphi 0, %s125
      %s140 = sphi 0, %s126
      %s146 = sphi 0, %s148
      %s149 = sphi 0, %s146
      %s150 = sphi 0, %s149
      %s166 = sphi 0, %s150
      %s172 = sphi 0, %s174
      %s175 = sphi 0, %s172
      %s176 = sphi 0, %s175
      %s192 = sphi 0, %s176
      %s198 = sphi 0, %s200
      %s201 = sphi 0, %s198
      %s202 = sphi 0, %s201
      %s218 = sphi 0, %s202
      %s224 = sphi 0, %s226
      %s227 = sphi 0, %s224
      %s228 = sphi 0, %s227
      %s244 = sphi 0, %s228
      %s250 = sphi 0, %s252
      %s253 = sphi 0, %s250
      %s254 = sphi 0, %s253
      %s270 = sphi 0, %s254
      %s276 = sphi 0, %s278
      %s279 = sphi 0, %s276
      %s280 = sphi 0, %s279
      %s296 = sphi 0, %s280
      %s302 = sphi 0, %s304
      %s305 = sphi 0, %s302
      %s306 = sphi 0, %s305
      %s322 = sphi 0, %s306
      %s328 = sphi 0, %s330
      %s331 = sphi 0, %s328
      %s332 = sphi 0, %s331
      %s348 = sphi 0, %s332
      %s354 = sphi 0, %s356
      %s357 = sphi 0, %s354
      %s358 = sphi 0, %s357
      %s374 = sphi 0, %s358
      %s380 = sphi 0, %s382
      %s383 = sphi 0, %s380
      %s384 = sphi 0, %s383
      %s400 = sphi 0, %s384
      %s406 = sphi 0, %s408
      %s409 = sphi 0, %s406
      %s410 = sphi 0, %s409
      %s426 = sphi 0, %s410
    $region4: #{tpu_custom_call.1} parent=1 // loop_header_branch
      %33 = sbr.rel (%p31) target = $region8
    $region5: #{tpu_custom_call.1} parent=1 // loop_body
      %s35 = ssub.s32 %s30, 1
      %s36 = ssub.s32 %s30, 2
      %s43 = sadd.s32 1, %s38
      %p44 = scmp.ge.s32.totalorder %s43, 2
      %s45 = scalar_select %p44, 0, %s43
      %s46 = sadd.s32 1, %s37
      %s47 = scalar_select %p44, %s46, %s37
      %p48 = scmp.ge.s32.totalorder %s47, 2
      %s49 = scalar_select %p48, 0, %s47
      %s50 = ssub.s32 %s37, %s49
      %p51 = scmp.eq.s32.totalorder %s50, 0
      %s53 = sadd.s32 %s52, 1
      %s54 = scalar_select %p51, %s52, %s53
      %p57 = pneg %p51
      %p58 = scmp.eq.s32.totalorder %s30, 3
      %p59 = por %p57, %p58
      %p60 = scmp.ne.s32.totalorder %s52, %s55
      %p61 = scmp.eq.s32.totalorder %s30, 0
      %p62 = por %p60, %p61
      %p63 = scmp.ne.s32.totalorder %s52, %s55
      %p64 = scmp.eq.s32.totalorder %s35, 3
      %p65 = por %p63, %p64
      %p66 = scmp.ne.s32.totalorder %s55, %s56
      %p67 = scmp.eq.s32.totalorder %s35, 0
      %p68 = por %p66, %p67
      %p69 = scmp.ne.s32.totalorder %s55, %s56
      %p70 = scmp.eq.s32.totalorder %s36, 3
      %p71 = por %p69, %p70
      %p73 = scmp.ne.s32.totalorder %s56, %s72
      %p74 = scmp.eq.s32.totalorder %s36, 0
      %p75 = por %p73, %p74
      %s76 = ssub.s32 %s37, %s49
      %p77 = scmp.eq.s32.totalorder %s76, 0
      %s79 = sadd.s32 %s78, 1
      %s80 = scalar_select %p77, %s78, %s79
      %p83 = pneg %p77
      %p84 = scmp.eq.s32.totalorder %s30, 3
      %p85 = por %p83, %p84
      %p86 = scmp.ne.s32.totalorder %s78, %s81
      %p87 = scmp.eq.s32.totalorder %s30, 0
      %p88 = por %p86, %p87
      %p89 = scmp.ne.s32.totalorder %s78, %s81
      %p90 = scmp.eq.s32.totalorder %s35, 3
      %p91 = por %p89, %p90
      %p92 = scmp.ne.s32.totalorder %s81, %s82
      %p93 = scmp.eq.s32.totalorder %s35, 0
      %p94 = por %p92, %p93
      %p95 = scmp.ne.s32.totalorder %s81, %s82
      %p96 = scmp.eq.s32.totalorder %s36, 3
      %p97 = por %p95, %p96
      %p99 = scmp.ne.s32.totalorder %s82, %s98
      %p100 = scmp.eq.s32.totalorder %s36, 0
      %p101 = por %p99, %p100
      %s103 = sadd.s32 %s102, 1
      %p106 = scmp.eq.s32.totalorder %s30, 3
      %p107 = scmp.ne.s32.totalorder %s102, %s104
      %p108 = scmp.eq.s32.totalorder %s30, 0
      %p109 = por %p107, %p108
      %p110 = scmp.ne.s32.totalorder %s102, %s104
      %p111 = scmp.eq.s32.totalorder %s35, 3
      %p112 = por %p110, %p111
      %p113 = scmp.ne.s32.totalorder %s104, %s105
      %p114 = scmp.eq.s32.totalorder %s35, 0
      %p115 = por %p113, %p114
      %p116 = scmp.ne.s32.totalorder %s104, %s105
      %p117 = scmp.eq.s32.totalorder %s36, 3
      %p118 = por %p116, %p117
      %p120 = scmp.ne.s32.totalorder %s105, %s119
      %p121 = scmp.eq.s32.totalorder %s36, 0
      %p122 = por %p120, %p121
      %s124 = sadd.s32 %s123, 1
      %p127 = scmp.eq.s32.totalorder %s30, 3
      %p128 = scmp.ne.s32.totalorder %s123, %s125
      %p129 = scmp.eq.s32.totalorder %s30, 0
      %p130 = por %p128, %p129
      %p131 = scmp.ne.s32.totalorder %s123, %s125
      %p132 = scmp.eq.s32.totalorder %s35, 3
      %p133 = por %p131, %p132
      %p134 = scmp.ne.s32.totalorder %s125, %s126
      %p135 = scmp.eq.s32.totalorder %s35, 0
      %p136 = por %p134, %p135
      %p137 = scmp.ne.s32.totalorder %s125, %s126
      %p138 = scmp.eq.s32.totalorder %s36, 3
      %p139 = por %p137, %p138
      %p141 = scmp.ne.s32.totalorder %s126, %s140
      %p142 = scmp.eq.s32.totalorder %s36, 0
      %p143 = por %p141, %p142
      %s144 = ssub.s32 %s38, %s45
      %p145 = scmp.eq.s32.totalorder %s144, 0
      %s147 = sadd.s32 %s146, 1
      %s148 = scalar_select %p145, %s146, %s147
      %p151 = pneg %p145
      %p152 = scmp.eq.s32.totalorder %s30, 3
      %p153 = por %p151, %p152
      %p154 = scmp.ne.s32.totalorder %s146, %s149
      %p155 = scmp.eq.s32.totalorder %s30, 0
      %p156 = por %p154, %p155
      %p157 = scmp.ne.s32.totalorder %s146, %s149
      %p158 = scmp.eq.s32.totalorder %s35, 3
      %p159 = por %p157, %p158
      %p160 = scmp.ne.s32.totalorder %s149, %s150
      %p161 = scmp.eq.s32.totalorder %s35, 0
      %p162 = por %p160, %p161
      %p163 = scmp.ne.s32.totalorder %s149, %s150
      %p164 = scmp.eq.s32.totalorder %s36, 3
      %p165 = por %p163, %p164
      %p167 = scmp.ne.s32.totalorder %s150, %s166
      %p168 = scmp.eq.s32.totalorder %s36, 0
      %p169 = por %p167, %p168
      %s170 = ssub.s32 %s38, %s45
      %p171 = scmp.eq.s32.totalorder %s170, 0
      %s173 = sadd.s32 %s172, 1
      %s174 = scalar_select %p171, %s172, %s173
      %p177 = pneg %p171
      %p178 = scmp.eq.s32.totalorder %s30, 3
      %p179 = por %p177, %p178
      %p180 = scmp.ne.s32.totalorder %s172, %s175
      %p181 = scmp.eq.s32.totalorder %s30, 0
      %p182 = por %p180, %p181
      %p183 = scmp.ne.s32.totalorder %s172, %s175
      %p184 = scmp.eq.s32.totalorder %s35, 3
      %p185 = por %p183, %p184
      %p186 = scmp.ne.s32.totalorder %s175, %s176
      %p187 = scmp.eq.s32.totalorder %s35, 0
      %p188 = por %p186, %p187
      %p189 = scmp.ne.s32.totalorder %s175, %s176
      %p190 = scmp.eq.s32.totalorder %s36, 3
      %p191 = por %p189, %p190
      %p193 = scmp.ne.s32.totalorder %s176, %s192
      %p194 = scmp.eq.s32.totalorder %s36, 0
      %p195 = por %p193, %p194
      %s196 = ssub.s32 %s38, %s45
      %p197 = scmp.eq.s32.totalorder %s196, 0
      %s199 = sadd.s32 %s198, 1
      %s200 = scalar_select %p197, %s198, %s199
      %p203 = pneg %p197
      %p204 = scmp.eq.s32.totalorder %s30, 3
      %p205 = por %p203, %p204
      %p206 = scmp.ne.s32.totalorder %s198, %s201
      %p207 = scmp.eq.s32.totalorder %s30, 0
      %p208 = por %p206, %p207
      %p209 = scmp.ne.s32.totalorder %s198, %s201
      %p210 = scmp.eq.s32.totalorder %s35, 3
      %p211 = por %p209, %p210
      %p212 = scmp.ne.s32.totalorder %s201, %s202
      %p213 = scmp.eq.s32.totalorder %s35, 0
      %p214 = por %p212, %p213
      %p215 = scmp.ne.s32.totalorder %s201, %s202
      %p216 = scmp.eq.s32.totalorder %s36, 3
      %p217 = por %p215, %p216
      %p219 = scmp.ne.s32.totalorder %s202, %s218
      %p220 = scmp.eq.s32.totalorder %s36, 0
      %p221 = por %p219, %p220
      %s222 = ssub.s32 %s38, %s45
      %p223 = scmp.eq.s32.totalorder %s222, 0
      %s225 = sadd.s32 %s224, 1
      %s226 = scalar_select %p223, %s224, %s225
      %p229 = pneg %p223
      %p230 = scmp.eq.s32.totalorder %s30, 3
      %p231 = por %p229, %p230
      %p232 = scmp.ne.s32.totalorder %s224, %s227
      %p233 = scmp.eq.s32.totalorder %s30, 0
      %p234 = por %p232, %p233
      %p235 = scmp.ne.s32.totalorder %s224, %s227
      %p236 = scmp.eq.s32.totalorder %s35, 3
      %p237 = por %p235, %p236
      %p238 = scmp.ne.s32.totalorder %s227, %s228
      %p239 = scmp.eq.s32.totalorder %s35, 0
      %p240 = por %p238, %p239
      %p241 = scmp.ne.s32.totalorder %s227, %s228
      %p242 = scmp.eq.s32.totalorder %s36, 3
      %p243 = por %p241, %p242
      %p245 = scmp.ne.s32.totalorder %s228, %s244
      %p246 = scmp.eq.s32.totalorder %s36, 0
      %p247 = por %p245, %p246
      %s248 = ssub.s32 %s38, %s45
      %p249 = scmp.eq.s32.totalorder %s248, 0
      %s251 = sadd.s32 %s250, 1
      %s252 = scalar_select %p249, %s250, %s251
      %p255 = pneg %p249
      %p256 = scmp.eq.s32.totalorder %s30, 3
      %p257 = por %p255, %p256
      %p258 = scmp.ne.s32.totalorder %s250, %s253
      %p259 = scmp.eq.s32.totalorder %s30, 0
      %p260 = por %p258, %p259
      %p261 = scmp.ne.s32.totalorder %s250, %s253
      %p262 = scmp.eq.s32.totalorder %s35, 3
      %p263 = por %p261, %p262
      %p264 = scmp.ne.s32.totalorder %s253, %s254
      %p265 = scmp.eq.s32.totalorder %s35, 0
      %p266 = por %p264, %p265
      %p267 = scmp.ne.s32.totalorder %s253, %s254
      %p268 = scmp.eq.s32.totalorder %s36, 3
      %p269 = por %p267, %p268
      %p271 = scmp.ne.s32.totalorder %s254, %s270
      %p272 = scmp.eq.s32.totalorder %s36, 0
      %p273 = por %p271, %p272
      %s274 = ssub.s32 %s38, %s45
      %p275 = scmp.eq.s32.totalorder %s274, 0
      %s277 = sadd.s32 %s276, 1
      %s278 = scalar_select %p275, %s276, %s277
      %p281 = pneg %p275
      %p282 = scmp.eq.s32.totalorder %s30, 3
      %p283 = por %p281, %p282
      %p284 = scmp.ne.s32.totalorder %s276, %s279
      %p285 = scmp.eq.s32.totalorder %s30, 0
      %p286 = por %p284, %p285
      %p287 = scmp.ne.s32.totalorder %s276, %s279
      %p288 = scmp.eq.s32.totalorder %s35, 3
      %p289 = por %p287, %p288
      %p290 = scmp.ne.s32.totalorder %s279, %s280
      %p291 = scmp.eq.s32.totalorder %s35, 0
      %p292 = por %p290, %p291
      %p293 = scmp.ne.s32.totalorder %s279, %s280
      %p294 = scmp.eq.s32.totalorder %s36, 3
      %p295 = por %p293, %p294
      %p297 = scmp.ne.s32.totalorder %s280, %s296
      %p298 = scmp.eq.s32.totalorder %s36, 0
      %p299 = por %p297, %p298
      %s300 = ssub.s32 %s38, %s45
      %p301 = scmp.eq.s32.totalorder %s300, 0
      %s303 = sadd.s32 %s302, 1
      %s304 = scalar_select %p301, %s302, %s303
      %p307 = pneg %p301
      %p308 = scmp.eq.s32.totalorder %s30, 3
      %p309 = por %p307, %p308
      %p310 = scmp.ne.s32.totalorder %s302, %s305
      %p311 = scmp.eq.s32.totalorder %s30, 0
      %p312 = por %p310, %p311
      %p313 = scmp.ne.s32.totalorder %s302, %s305
      %p314 = scmp.eq.s32.totalorder %s35, 3
      %p315 = por %p313, %p314
      %p316 = scmp.ne.s32.totalorder %s305, %s306
      %p317 = scmp.eq.s32.totalorder %s35, 0
      %p318 = por %p316, %p317
      %p319 = scmp.ne.s32.totalorder %s305, %s306
      %p320 = scmp.eq.s32.totalorder %s36, 3
      %p321 = por %p319, %p320
      %p323 = scmp.ne.s32.totalorder %s306, %s322
      %p324 = scmp.eq.s32.totalorder %s36, 0
      %p325 = por %p323, %p324
      %s326 = ssub.s32 %s38, %s45
      %p327 = scmp.eq.s32.totalorder %s326, 0
      %s329 = sadd.s32 %s328, 1
      %s330 = scalar_select %p327, %s328, %s329
      %p333 = pneg %p327
      %p334 = scmp.eq.s32.totalorder %s30, 3
      %p335 = por %p333, %p334
      %p336 = scmp.ne.s32.totalorder %s328, %s331
      %p337 = scmp.eq.s32.totalorder %s30, 0
      %p338 = por %p336, %p337
      %p339 = scmp.ne.s32.totalorder %s328, %s331
      %p340 = scmp.eq.s32.totalorder %s35, 3
      %p341 = por %p339, %p340
      %p342 = scmp.ne.s32.totalorder %s331, %s332
      %p343 = scmp.eq.s32.totalorder %s35, 0
      %p344 = por %p342, %p343
      %p345 = scmp.ne.s32.totalorder %s331, %s332
      %p346 = scmp.eq.s32.totalorder %s36, 3
      %p347 = por %p345, %p346
      %p349 = scmp.ne.s32.totalorder %s332, %s348
      %p350 = scmp.eq.s32.totalorder %s36, 0
      %p351 = por %p349, %p350
      %s352 = ssub.s32 %s38, %s45
      %p353 = scmp.eq.s32.totalorder %s352, 0
      %s355 = sadd.s32 %s354, 1
      %s356 = scalar_select %p353, %s354, %s355
      %p359 = pneg %p353
      %p360 = scmp.eq.s32.totalorder %s30, 3
      %p361 = por %p359, %p360
      %p362 = scmp.ne.s32.totalorder %s354, %s357
      %p363 = scmp.eq.s32.totalorder %s30, 0
      %p364 = por %p362, %p363
      %p365 = scmp.ne.s32.totalorder %s354, %s357
      %p366 = scmp.eq.s32.totalorder %s35, 3
      %p367 = por %p365, %p366
      %p368 = scmp.ne.s32.totalorder %s357, %s358
      %p369 = scmp.eq.s32.totalorder %s35, 0
      %p370 = por %p368, %p369
      %p371 = scmp.ne.s32.totalorder %s357, %s358
      %p372 = scmp.eq.s32.totalorder %s36, 3
      %p373 = por %p371, %p372
      %p375 = scmp.ne.s32.totalorder %s358, %s374
      %p376 = scmp.eq.s32.totalorder %s36, 0
      %p377 = por %p375, %p376
      %s378 = ssub.s32 %s38, %s45
      %p379 = scmp.eq.s32.totalorder %s378, 0
      %s381 = sadd.s32 %s380, 1
      %s382 = scalar_select %p379, %s380, %s381
      %p385 = pneg %p379
      %p386 = scmp.eq.s32.totalorder %s30, 3
      %p387 = por %p385, %p386
      %p388 = scmp.ne.s32.totalorder %s380, %s383
      %p389 = scmp.eq.s32.totalorder %s30, 0
      %p390 = por %p388, %p389
      %p391 = scmp.ne.s32.totalorder %s380, %s383
      %p392 = scmp.eq.s32.totalorder %s35, 3
      %p393 = por %p391, %p392
      %p394 = scmp.ne.s32.totalorder %s383, %s384
      %p395 = scmp.eq.s32.totalorder %s35, 0
      %p396 = por %p394, %p395
      %p397 = scmp.ne.s32.totalorder %s383, %s384
      %p398 = scmp.eq.s32.totalorder %s36, 3
      %p399 = por %p397, %p398
      %p401 = scmp.ne.s32.totalorder %s384, %s400
      %p402 = scmp.eq.s32.totalorder %s36, 0
      %p403 = por %p401, %p402
      %s404 = ssub.s32 %s37, %s49
      %p405 = scmp.eq.s32.totalorder %s404, 0
      %s407 = sadd.s32 %s406, 1
      %s408 = scalar_select %p405, %s406, %s407
      %p411 = pneg %p405
      %p412 = scmp.eq.s32.totalorder %s30, 3
      %p413 = por %p411, %p412
      %p414 = scmp.ne.s32.totalorder %s406, %s409
      %p415 = scmp.eq.s32.totalorder %s30, 0
      %p416 = por %p414, %p415
      %p417 = scmp.ne.s32.totalorder %s406, %s409
      %p418 = scmp.eq.s32.totalorder %s35, 3
      %p419 = por %p417, %p418
      %p420 = scmp.ne.s32.totalorder %s409, %s410
      %p421 = scmp.eq.s32.totalorder %s35, 0
      %p422 = por %p420, %p421
      %p423 = scmp.ne.s32.totalorder %s409, %s410
      %p424 = scmp.eq.s32.totalorder %s36, 3
      %p425 = por %p423, %p424
      %p427 = scmp.ne.s32.totalorder %s410, %s426
      %p428 = scmp.eq.s32.totalorder %s36, 0
      %p429 = por %p427, %p428
      %p430 = scmp.le.s32.totalorder 1, %s30
      %p431 = scmp.lt.s32.totalorder %s30, 5
      %p432 = pnand %p430, %p431
      %p433 = pneg %p432
      // Predicated region
      $region9: #{tpu_custom_call.1} parent=5 // pred_check
        _
      $region10: #{tpu_custom_call.1} parent=5 // pred_check_branch
        %435 = sbr.rel (%p432) target = $region12
      $region11: #{tpu_custom_call.1} parent=5 // pred_region
        %s436 = ssub.s32 %s30, 1
        // Predicated region
        $region13: #{tpu_custom_call.1} parent=11 // pred_check
          %p437 = pneg %p115
        $region14: #{tpu_custom_call.1} parent=11 // pred_check_branch
          %439 = sbr.rel (%p437) target = $region16
        $region15: #{tpu_custom_call.1} parent=11 // pred_region
          %441 = vsyncadd [#allocation8], 0
          %s442 = sshll.u32 %s2, 4
          %s443 = int_to_ptr.hbm [resolvable:$true] %s442
          %s444 = sshll.u32 [#allocation9], 4
          %s445 = int_to_ptr.vmem [resolvable:$true] %s444
          %450 = dma.hbm_to_vmem [thread:$0]  %s443, 256, %s445, [#allocation8], 128, 128, 8
        $region16: #{tpu_custom_call.1} parent=11 // pred_fallthru
          _
        // Predicated region
        $region17: #{tpu_custom_call.1} parent=11 // pred_check
          %p451 = pneg %p136
        $region18: #{tpu_custom_call.1} parent=11 // pred_check_branch
          %453 = sbr.rel (%p451) target = $region20
        $region19: #{tpu_custom_call.1} parent=11 // pred_region
          %455 = vsyncadd [#allocation11], 0
          %s457 = sshll.u32 %s3, 4
          %s458 = int_to_ptr.hbm [resolvable:$true] %s457
          %s459 = sshll.u32 [#allocation10], 4
          %s460 = int_to_ptr.vmem [resolvable:$true] %s459
          %462 = dma.hbm_to_vmem [thread:$0]  %s458, 16, %s460, [#allocation11]
        $region20: #{tpu_custom_call.1} parent=11 // pred_fallthru
          _
      $region12: #{tpu_custom_call.1} parent=5 // pred_fallthru
        _
      %p463 = scmp.lt.s32.totalorder %s30, 4
      // Predicated region
      $region21: #{tpu_custom_call.1} parent=5 // pred_check
        %p464 = pneg %p463
      $region22: #{tpu_custom_call.1} parent=5 // pred_check_branch
        %466 = sbr.rel (%p464) target = $region24
      $region23: #{tpu_custom_call.1} parent=5 // pred_region
        // Predicated region
        $region25: #{tpu_custom_call.1} parent=23 // pred_check
          %p467 = pneg %p62
        $region26: #{tpu_custom_call.1} parent=23 // pred_check_branch
          %469 = sbr.rel (%p467) target = $region28
        $region27: #{tpu_custom_call.1} parent=23 // pred_region
          %s470 = sand.u32 %s30, 1
          %s471 = scalar_lea.sflag [#allocation5], %s470
          %s472 = sand.u32 %s52, 1
          %s473 = smul.addr %s472, 8
          %s474 = scalar_lea.vmem [#allocation4], %s473
          %476 = vsyncadd %s471, 0
          %s477 = smul.addr %s37, 8
          %s478 = scalar_lea.hbm %s0, %s477
          %s480 = sshll.u32 %s478, 4
          %s481 = int_to_ptr.hbm [resolvable:$true] %s480
          %s482 = sshll.u32 %s474, 4
          %s483 = int_to_ptr.vmem [resolvable:$true] %s482
          %485 = dma.hbm_to_vmem [thread:$0]  %s481, 128, %s483, %s471
        $region28: #{tpu_custom_call.1} parent=23 // pred_fallthru
          _
        // Predicated region
        $region29: #{tpu_custom_call.1} parent=23 // pred_check
          %p486 = pneg %p88
        $region30: #{tpu_custom_call.1} parent=23 // pred_check_branch
          %488 = sbr.rel (%p486) target = $region32
        $region31: #{tpu_custom_call.1} parent=23 // pred_region
          %s489 = sand.u32 %s30, 1
          %s490 = scalar_lea.sflag [#allocation8], %s489
          %s491 = sand.u32 %s78, 1
          %s492 = smul.addr %s491, 2
          %s493 = scalar_lea.vmem [#allocation7], %s492
          %495 = vsyncadd %s490, 0
          %s496 = smul.addr %s37, 2
          %s497 = scalar_lea.hbm %s1, %s496
          %s499 = sshll.u32 %s497, 4
          %s500 = int_to_ptr.hbm [resolvable:$true] %s499
          %s501 = sshll.u32 %s493, 4
          %s502 = int_to_ptr.vmem [resolvable:$true] %s501
          %504 = dma.hbm_to_vmem [thread:$0]  %s500, 32, %s502, %s490
        $region32: #{tpu_custom_call.1} parent=23 // pred_fallthru
          _
        // Predicated region
        $region33: #{tpu_custom_call.1} parent=23 // pred_check
          %p505 = pneg %p156
        $region34: #{tpu_custom_call.1} parent=23 // pred_check_branch
          %507 = sbr.rel (%p505) target = $region36
        $region35: #{tpu_custom_call.1} parent=23 // pred_region
          %s508 = sand.u32 %s30, 1
          %s509 = scalar_lea.sflag [#allocation5], %s508
          %s510 = sand.u32 %s146, 1
          %s511 = smul.addr %s510, 32
          %s512 = scalar_lea.vmem [#allocation12], %s511
          %514 = vsyncadd %s509, 0
          %s515 = smul.addr %s38, 4
          %s516 = smul.addr %s515, 8
          %s517 = scalar_lea.hbm %s4, %s516
          %s518 = sshll.u32 %s517, 4
          %s519 = int_to_ptr.hbm [resolvable:$true] %s518
          %s520 = sshll.u32 %s512, 4
          %s521 = int_to_ptr.vmem [resolvable:$true] %s520
          %526 = dma.hbm_to_vmem [thread:$0]  %s519, 512, %s521, %s509, 128, 128, 8
        $region36: #{tpu_custom_call.1} parent=23 // pred_fallthru
          _
        // Predicated region
        $region37: #{tpu_custom_call.1} parent=23 // pred_check
          %p527 = pneg %p182
        $region38: #{tpu_custom_call.1} parent=23 // pred_check_branch
          %529 = sbr.rel (%p527) target = $region40
        $region39: #{tpu_custom_call.1} parent=23 // pred_region
          %p530 = scmp.lt.s32.totalorder %s38, 1
          %s531 = scalar_select %p530, %s38, 1
          %s532 = scalar_lea.vmem %s5, %s531
        $region40: #{tpu_custom_call.1} parent=23 // pred_fallthru
          _
        // Predicated region
        $region41: #{tpu_custom_call.1} parent=23 // pred_check
          %p533 = pneg %p208
        $region42: #{tpu_custom_call.1} parent=23 // pred_check_branch
          %535 = sbr.rel (%p533) target = $region44
        $region43: #{tpu_custom_call.1} parent=23 // pred_region
          %s536 = sand.u32 %s30, 1
          %s537 = scalar_lea.sflag [#allocation8], %s536
          %s538 = sand.u32 %s198, 1
          %s539 = smul.addr %s538, 32
          %s540 = scalar_lea.vmem [#allocation13], %s539
          %542 = vsyncadd %s537, 0
          %s543 = smul.addr %s38, 4
          %s544 = smul.addr %s543, 8
          %s545 = scalar_lea.hbm %s6, %s544
          %s546 = sshll.u32 %s545, 4
          %s547 = int_to_ptr.hbm [resolvable:$true] %s546
          %s548 = sshll.u32 %s540, 4
          %s549 = int_to_ptr.vmem [resolvable:$true] %s548
          %554 = dma.hbm_to_vmem [thread:$0]  %s547, 512, %s549, %s537, 128, 128, 8
        $region44: #{tpu_custom_call.1} parent=23 // pred_fallthru
          _
        // Predicated region
        $region45: #{tpu_custom_call.1} parent=23 // pred_check
          %p555 = pneg %p234
        $region46: #{tpu_custom_call.1} parent=23 // pred_check_branch
          %557 = sbr.rel (%p555) target = $region48
        $region47: #{tpu_custom_call.1} parent=23 // pred_region
          %p558 = scmp.lt.s32.totalorder %s38, 1
          %s559 = scalar_select %p558, %s38, 1
          %s560 = scalar_lea.vmem %s7, %s559
        $region48: #{tpu_custom_call.1} parent=23 // pred_fallthru
          _
        // Predicated region
        $region49: #{tpu_custom_call.1} parent=23 // pred_check
          %p561 = pneg %p260
        $region50: #{tpu_custom_call.1} parent=23 // pred_check_branch
          %563 = sbr.rel (%p561) target = $region52
        $region51: #{tpu_custom_call.1} parent=23 // pred_region
          %s564 = sand.u32 %s30, 1
          %s565 = scalar_lea.sflag [#allocation5], %s564
          %s566 = sand.u32 %s250, 1
          %s567 = smul.addr %s566, 32
          %s568 = scalar_lea.vmem [#allocation14], %s567
          %570 = vsyncadd %s565, 0
          %s571 = smul.addr %s38, 4
          %s572 = smul.addr %s571, 8
          %s573 = scalar_lea.hbm %s8, %s572
          %s574 = sshll.u32 %s573, 4
          %s575 = int_to_ptr.hbm [resolvable:$true] %s574
          %s576 = sshll.u32 %s568, 4
          %s577 = int_to_ptr.vmem [resolvable:$true] %s576
          %582 = dma.hbm_to_vmem [thread:$0]  %s575, 512, %s577, %s565, 128, 128, 8
        $region52: #{tpu_custom_call.1} parent=23 // pred_fallthru
          _
        // Predicated region
        $region53: #{tpu_custom_call.1} parent=23 // pred_check
          %p583 = pneg %p286
        $region54: #{tpu_custom_call.1} parent=23 // pred_check_branch
          %585 = sbr.rel (%p583) target = $region56
        $region55: #{tpu_custom_call.1} parent=23 // pred_region
          %p586 = scmp.lt.s32.totalorder %s38, 1
          %s587 = scalar_select %p586, %s38, 1
          %s588 = scalar_lea.vmem %s9, %s587
        $region56: #{tpu_custom_call.1} parent=23 // pred_fallthru
          _
        // Predicated region
        $region57: #{tpu_custom_call.1} parent=23 // pred_check
          %p589 = pneg %p312
        $region58: #{tpu_custom_call.1} parent=23 // pred_check_branch
          %591 = sbr.rel (%p589) target = $region60
        $region59: #{tpu_custom_call.1} parent=23 // pred_region
          %s592 = sand.u32 %s30, 1
          %s593 = scalar_lea.sflag [#allocation8], %s592
          %s594 = sand.u32 %s302, 1
          %s595 = smul.addr %s594, 32
          %s596 = scalar_lea.vmem [#allocation15], %s595
          %598 = vsyncadd %s593, 0
          %s599 = smul.addr %s38, 4
          %s600 = smul.addr %s599, 8
          %s601 = scalar_lea.hbm %s10, %s600
          %s602 = sshll.u32 %s601, 4
          %s603 = int_to_ptr.hbm [resolvable:$true] %s602
          %s604 = sshll.u32 %s596, 4
          %s605 = int_to_ptr.vmem [resolvable:$true] %s604
          %610 = dma.hbm_to_vmem [thread:$0]  %s603, 512, %s605, %s593, 128, 128, 8
        $region60: #{tpu_custom_call.1} parent=23 // pred_fallthru
          _
        // Predicated region
        $region61: #{tpu_custom_call.1} parent=23 // pred_check
          %p611 = pneg %p338
        $region62: #{tpu_custom_call.1} parent=23 // pred_check_branch
          %613 = sbr.rel (%p611) target = $region64
        $region63: #{tpu_custom_call.1} parent=23 // pred_region
          %p614 = scmp.lt.s32.totalorder %s38, 1
          %s615 = scalar_select %p614, %s38, 1
          %s616 = scalar_lea.vmem %s11, %s615
        $region64: #{tpu_custom_call.1} parent=23 // pred_fallthru
          _
        // Predicated region
        $region65: #{tpu_custom_call.1} parent=23 // pred_check
          %p617 = pneg %p364
        $region66: #{tpu_custom_call.1} parent=23 // pred_check_branch
          %619 = sbr.rel (%p617) target = $region68
        $region67: #{tpu_custom_call.1} parent=23 // pred_region
          %p620 = scmp.lt.s32.totalorder %s38, 1
          %s621 = scalar_select %p620, %s38, 1
          %s622 = scalar_lea.vmem %s12, %s621
        $region68: #{tpu_custom_call.1} parent=23 // pred_fallthru
          _
        // Predicated region
        $region69: #{tpu_custom_call.1} parent=23 // pred_check
          %p623 = pneg %p390
        $region70: #{tpu_custom_call.1} parent=23 // pred_check_branch
          %625 = sbr.rel (%p623) target = $region72
        $region71: #{tpu_custom_call.1} parent=23 // pred_region
          %p626 = scmp.lt.s32.totalorder %s38, 1
          %s627 = scalar_select %p626, %s38, 1
          %s628 = scalar_lea.vmem %s13, %s627
        $region72: #{tpu_custom_call.1} parent=23 // pred_fallthru
          _
      $region24: #{tpu_custom_call.1} parent=5 // pred_fallthru
        _
      %p629 = scmp.le.s32.totalorder 1, %s30
      %p630 = scmp.lt.s32.totalorder %s30, 5
      %p631 = pnand %p629, %p630
      %p632 = pneg %p631
      // Predicated region
      $region73: #{tpu_custom_call.1} parent=5 // pred_check
        _
      $region74: #{tpu_custom_call.1} parent=5 // pred_check_branch
        %634 = sbr.rel (%p631) target = $region76
      $region75: #{tpu_custom_call.1} parent=5 // pred_region
        %s635 = ssub.s32 %s30, 1
        %s636 = sand.u32 %s35, 1
        %s637 = scalar_lea.sflag [#allocation5], %s636
        %s638 = sand.u32 %s55, 1
        %s639 = smul.addr %s638, 8
        %s640 = scalar_lea.vmem [#allocation4], %s639
        // Predicated region
        $region77: #{tpu_custom_call.1} parent=75 // pred_check
          %p641 = pneg %p68
        $region78: #{tpu_custom_call.1} parent=75 // pred_check_branch
          %643 = sbr.rel (%p641) target = $region80
        $region79: #{tpu_custom_call.1} parent=75 // pred_region
          %645 = dma.done %s637, 128
        $region80: #{tpu_custom_call.1} parent=75 // pred_fallthru
          _
        %s646 = sand.u32 %s35, 1
        %s647 = scalar_lea.sflag [#allocation8], %s646
        %s648 = sand.u32 %s81, 1
        %s649 = smul.addr %s648, 2
        %s650 = scalar_lea.vmem [#allocation7], %s649
        // Predicated region
        $region81: #{tpu_custom_call.1} parent=75 // pred_check
          %p651 = pneg %p94
        $region82: #{tpu_custom_call.1} parent=75 // pred_check_branch
          %653 = sbr.rel (%p651) target = $region84
        $region83: #{tpu_custom_call.1} parent=75 // pred_region
          %655 = dma.done %s647, 32
        $region84: #{tpu_custom_call.1} parent=75 // pred_fallthru
          _
        // Predicated region
        $region85: #{tpu_custom_call.1} parent=75 // pred_check
          %p656 = pneg %p115
        $region86: #{tpu_custom_call.1} parent=75 // pred_check_branch
          %658 = sbr.rel (%p656) target = $region88
        $region87: #{tpu_custom_call.1} parent=75 // pred_region
          %660 = dma.done [#allocation8], 256
        $region88: #{tpu_custom_call.1} parent=75 // pred_fallthru
          _
        // Predicated region
        $region89: #{tpu_custom_call.1} parent=75 // pred_check
          %p661 = pneg %p136
        $region90: #{tpu_custom_call.1} parent=75 // pred_check_branch
          %663 = sbr.rel (%p661) target = $region92
        $region91: #{tpu_custom_call.1} parent=75 // pred_region
          %665 = dma.done [#allocation11], 16
        $region92: #{tpu_custom_call.1} parent=75 // pred_fallthru
          _
        %s666 = sand.u32 %s35, 1
        %s667 = scalar_lea.sflag [#allocation5], %s666
        %s668 = sand.u32 %s149, 1
        %s669 = smul.addr %s668, 32
        %s670 = scalar_lea.vmem [#allocation12], %s669
        // Predicated region
        $region93: #{tpu_custom_call.1} parent=75 // pred_check
          %p671 = pneg %p162
        $region94: #{tpu_custom_call.1} parent=75 // pred_check_branch
          %673 = sbr.rel (%p671) target = $region96
        $region95: #{tpu_custom_call.1} parent=75 // pred_region
          %675 = dma.done %s667, 512
        $region96: #{tpu_custom_call.1} parent=75 // pred_fallthru
          _
        %s676 = sand.u32 %s35, 1
        %s677 = scalar_lea.sflag [#allocation8], %s676
        %s678 = sand.u32 %s201, 1
        %s679 = smul.addr %s678, 32
        %s680 = scalar_lea.vmem [#allocation13], %s679
        // Predicated region
        $region97: #{tpu_custom_call.1} parent=75 // pred_check
          %p681 = pneg %p214
        $region98: #{tpu_custom_call.1} parent=75 // pred_check_branch
          %683 = sbr.rel (%p681) target = $region100
        $region99: #{tpu_custom_call.1} parent=75 // pred_region
          %685 = dma.done %s677, 512
        $region100: #{tpu_custom_call.1} parent=75 // pred_fallthru
          _
        %s686 = sand.u32 %s35, 1
        %s687 = scalar_lea.sflag [#allocation5], %s686
        %s688 = sand.u32 %s253, 1
        %s689 = smul.addr %s688, 32
        %s690 = scalar_lea.vmem [#allocation14], %s689
        // Predicated region
        $region101: #{tpu_custom_call.1} parent=75 // pred_check
          %p691 = pneg %p266
        $region102: #{tpu_custom_call.1} parent=75 // pred_check_branch
          %693 = sbr.rel (%p691) target = $region104
        $region103: #{tpu_custom_call.1} parent=75 // pred_region
          %695 = dma.done %s687, 512
        $region104: #{tpu_custom_call.1} parent=75 // pred_fallthru
          _
        %s696 = sand.u32 %s35, 1
        %s697 = scalar_lea.sflag [#allocation8], %s696
        %s698 = sand.u32 %s305, 1
        %s699 = smul.addr %s698, 32
        %s700 = scalar_lea.vmem [#allocation15], %s699
        // Predicated region
        $region105: #{tpu_custom_call.1} parent=75 // pred_check
          %p701 = pneg %p318
        $region106: #{tpu_custom_call.1} parent=75 // pred_check_branch
          %703 = sbr.rel (%p701) target = $region108
        $region107: #{tpu_custom_call.1} parent=75 // pred_region
          %705 = dma.done %s697, 512
        $region108: #{tpu_custom_call.1} parent=75 // pred_fallthru
          _
        %s706 = sand.u32 %s35, 1
        %s707 = scalar_lea.sflag [#allocation5], %s706
        %s708 = sand.u32 %s55, 1
        %s709 = smul.addr %s708, 8
        %s710 = scalar_lea.vmem [#allocation4], %s709
        %p711 = pneg %p68
        %p712 = pneg %p65
        %s713 = sand.u32 %s35, 1
        %s714 = scalar_lea.sflag [#allocation8], %s713
        %s715 = sand.u32 %s81, 1
        %s716 = smul.addr %s715, 2
        %s717 = scalar_lea.vmem [#allocation7], %s716
        %p718 = pneg %p94
        %p719 = pneg %p91
        %p720 = pneg %p115
        %p721 = pneg %p112
        %p722 = pneg %p136
        %p723 = pneg %p133
        %s724 = sand.u32 %s35, 1
        %s725 = scalar_lea.sflag [#allocation5], %s724
        %s726 = sand.u32 %s149, 1
        %s727 = smul.addr %s726, 32
        %s728 = scalar_lea.vmem [#allocation12], %s727
        %p729 = pneg %p162
        %p730 = pneg %p159
        %p731 = scmp.lt.s32.totalorder %s40, 1
        %s732 = scalar_select %p731, %s40, 1
        %s733 = scalar_lea.vmem %s5, %s732
        %p734 = pneg %p188
        %p735 = pneg %p185
        %s736 = sand.u32 %s35, 1
        %s737 = scalar_lea.sflag [#allocation8], %s736
        %s738 = sand.u32 %s201, 1
        %s739 = smul.addr %s738, 32
        %s740 = scalar_lea.vmem [#allocation13], %s739
        %p741 = pneg %p214
        %p742 = pneg %p211
        %p743 = scmp.lt.s32.totalorder %s40, 1
        %s744 = scalar_select %p743, %s40, 1
        %s745 = scalar_lea.vmem %s7, %s744
        %p746 = pneg %p240
        %p747 = pneg %p237
        %s748 = sand.u32 %s35, 1
        %s749 = scalar_lea.sflag [#allocation5], %s748
        %s750 = sand.u32 %s253, 1
        %s751 = smul.addr %s750, 32
        %s752 = scalar_lea.vmem [#allocation14], %s751
        %p753 = pneg %p266
        %p754 = pneg %p263
        %p755 = scmp.lt.s32.totalorder %s40, 1
        %s756 = scalar_select %p755, %s40, 1
        %s757 = scalar_lea.vmem %s9, %s756
        %p758 = pneg %p292
        %p759 = pneg %p289
        %s760 = sand.u32 %s35, 1
        %s761 = scalar_lea.sflag [#allocation8], %s760
        %s762 = sand.u32 %s305, 1
        %s763 = smul.addr %s762, 32
        %s764 = scalar_lea.vmem [#allocation15], %s763
        %p765 = pneg %p318
        %p766 = pneg %p315
        %p767 = scmp.lt.s32.totalorder %s40, 1
        %s768 = scalar_select %p767, %s40, 1
        %s769 = scalar_lea.vmem %s11, %s768
        %p770 = pneg %p344
        %p771 = pneg %p341
        %p772 = scmp.lt.s32.totalorder %s40, 1
        %s773 = scalar_select %p772, %s40, 1
        %s774 = scalar_lea.vmem %s12, %s773
        %p775 = pneg %p370
        %p776 = pneg %p367
        %p777 = scmp.lt.s32.totalorder %s40, 1
        %s778 = scalar_select %p777, %s40, 1
        %s779 = scalar_lea.vmem %s13, %s778
        %p780 = pneg %p396
        %p781 = pneg %p393
        %p782 = pneg %p422
        %p783 = pneg %p419
        %s784 = sand.u32 %s409, 1
        %s785 = scalar_lea.sflag [#allocation6], %s784
        %s786 = sand.u32 %s409, 1
        %s787 = smul.addr %s786, 8
        %s788 = scalar_lea.vmem [#allocation16], %s787
        %p789 = scmp.lt.s32.totalorder %s40, 1
        %s790 = scalar_select %p789, %s40, 1
        %s791 = scalar_lea.vmem %s5, %s790
        %p792 = scmp.lt.s32.totalorder %s40, 1
        %s793 = scalar_select %p792, %s40, 1
        %s794 = scalar_lea.vmem %s7, %s793
        %p795 = scmp.lt.s32.totalorder %s40, 1
        %s796 = scalar_select %p795, %s40, 1
        %s797 = scalar_lea.vmem %s9, %s796
        %p798 = scmp.lt.s32.totalorder %s40, 1
        %s799 = scalar_select %p798, %s40, 1
        %s800 = scalar_lea.vmem %s11, %s799
        %p801 = scmp.lt.s32.totalorder %s40, 1
        %s802 = scalar_select %p801, %s40, 1
        %s803 = scalar_lea.vmem %s12, %s802
        %p804 = scmp.lt.s32.totalorder %s40, 1
        %s805 = scalar_select %p804, %s40, 1
        %s806 = scalar_lea.vmem %s13, %s805
        %p807 = scmp.eq.s32.totalorder %s40, 0
        // Predicated region
        $region109: #{tpu_custom_call.1} parent=75 // pred_check
          %p808 = pneg %p807
        $region110: #{tpu_custom_call.1} parent=75 // pred_check_branch
          %810 = sbr.rel (%p808) target = $region112
        $region111: #{tpu_custom_call.1} parent=75 // pred_region
          %v811 = vld [vmem:[%s640] sm:$0xff]
          %v812 = vld [vmem:[#allocation9] sm:$0xff]
          %v813 = vld [vmem:[#allocation9 + $0x8] sm:$0xff]
          %v814 = vld [vmem:[#allocation10] sm:$0x1]
          %v816 = vperm.slane %v814, 0
          %vm818 = vcmask 130048
          %v820 = vsel %vm818, %v811, 0
          %822 = vmatpush.msra.mxu0 0.0
          %823 = vmatpush.msra.mxu0 0.0
          %824 = vmatpush.msra.mxu0 0.0
          %825 = vmatpush.msra.mxu0 0.0
          %826 = vmatpush.msra.mxu0 0.0
          %827 = vmatpush.msra.mxu0 0.0
          %828 = vmatpush.msra.mxu0 0.0
          %829 = vmatpush.msra.mxu0 0.0
          %830 = vmatpush.msra.mxu0 0.0
          %831 = vmatpush.msra.mxu0 0.0
          %832 = vmatpush.msra.mxu0 0.0
          %833 = vmatpush.msra.mxu0 0.0
          %834 = vmatpush.msra.mxu0 0.0
          %835 = vmatpush.msra.mxu0 0.0
          %836 = vmatpush.msra.mxu0 %v813
          %837 = vmatpush.msra.mxu0 %v812
          %838 = vmatmul.f32.gmra.mxu0 %v820
          %v839 = vpop.f32.mrf.mxu0
          %v840 = vadd.f32 %v816, %v839
          %841 = vdwg.mxu0
          %vm842 = vcmask 261120
          %843 = vst.msk [vmem:[#allocation2] sm:$0xff] %vm842, %v840
        $region112: #{tpu_custom_call.1} parent=75 // pred_fallthru
          _
        %v844 = vld [vmem:[#allocation2] sm:$0xff]
        %v845 = vld [vmem:[%s650] sm:$0x3]
        %v846 = vunpack.c.0.s8 %v845
        %vm847 = vcmp.gt.s32.totalorder %v846, 0
        %v848 = vld [vmem:[%s803] sm:$0x1]
        %v849 = vld [vmem:[%s806] sm:$0x1]
        %v850 = vld [vmem:[%s670] sm:$0xff]
        %v851 = vld [vmem:[%s670 + $0x8] sm:$0xff]
        %v852 = vld [vmem:[%s670 + $0x10] sm:$0xff]
        %v853 = vld [vmem:[%s670 + $0x18] sm:$0xff]
        %v854 = vld [vmem:[%s791] sm:$0x1]
        %v856 = vperm.slane %v854, 0
        %vm858 = vcmask 261120
        %v860 = vsel %vm858, %v844, 0
        %862 = vmatpush.msra.mxu0 0.0
        %863 = vmatpush.msra.mxu0 0.0
        %864 = vmatpush.msra.mxu0 0.0
        %865 = vmatpush.msra.mxu0 0.0
        %866 = vmatpush.msra.mxu0 0.0
        %867 = vmatpush.msra.mxu0 0.0
        %868 = vmatpush.msra.mxu0 0.0
        %869 = vmatpush.msra.mxu0 0.0
        %870 = vmatpush.msra.mxu0 0.0
        %871 = vmatpush.msra.mxu0 0.0
        %872 = vmatpush.msra.mxu0 0.0
        %873 = vmatpush.msra.mxu0 0.0
        %874 = vmatpush.msra.mxu0 %v853
        %875 = vmatpush.msra.mxu0 %v852
        %876 = vmatpush.msra.mxu0 %v851
        %877 = vmatpush.msra.mxu0 %v850
        %878 = vmatmul.f32.gmra.mxu0 %v860
        %v879 = vpop.f32.mrf.mxu0
        %v880 = vadd.f32 %v856, %v879
        %881 = vdwg.mxu0
        %v882 = vmul.f32 %v880, 0.35355338
        %884 = vrot.lane.b32.xlu0 %v880, 96
        %v885 = vpop.permute.xlu0 %884
        %vm886 = vcmask 64512
        %v888 = vsel %vm886, %v882, 0
        %v890 = vsel %vm886, %v885, 0
        %892 = vmatpush.xpose.msra.mxu0 0.0
        %893 = vmatpush.xpose.msra.mxu0 0.0
        %894 = vmatpush.xpose.msra.mxu0 0.0
        %895 = vmatpush.xpose.msra.mxu0 0.0
        %896 = vmatpush.xpose.msra.mxu0 0.0
        %897 = vmatpush.xpose.msra.mxu0 0.0
        %898 = vmatpush.xpose.msra.mxu0 0.0
        %899 = vmatpush.xpose.msra.mxu0 0.0
        %900 = vmatpush.xpose.msra.mxu0 0.0
        %901 = vmatpush.xpose.msra.mxu0 0.0
        %902 = vmatpush.xpose.msra.mxu0 0.0
        %903 = vmatpush.xpose.msra.mxu0 0.0
        %904 = vmatpush.xpose.msra.mxu0 0.0
        %905 = vmatpush.xpose.msra.mxu0 0.0
        %906 = vmatpush.xpose.msra.mxu0 0.0
        %907 = vmatpush.xpose.msra.mxu0 %v890
        %908 = vmatmul.f32.gmra.mxu0 %v888
        %v909 = vpop.f32.mrf.mxu0
        %v910 = vadd.f32 0.0, %v909
        %911 = vdwg.mxu0
        %v912 = vsel %vm847, %v910, -1e+09
        %v913 = vsel %vm886, %v912, -inf
        %914 = vmax.xlane.f32.xlu0 %v913
        %v915 = vpop.xlane.xlu0 %914
        %v916 = vsub.f32 %v912, %v915
        %v917 = vmul.f32 %v916, 1.442695
        %v918 = vpow.pop %v917
        %v919 = vsel %vm886, %v918, 0.0
        %920 = vadd.xlane.f32.xlu0 %v919
        %v921 = vpop.xlane.xlu0 %920
        %v922 = vrcp.pop %v921
        %v923 = vmul.f32 %v918, %v922
        %v924 = vsel %vm847, %v923, 0.0
        %925 = vrot.lane.b32.xlu0 %v880, 64
        %v926 = vpop.permute.xlu0 %925
        %v929 = vsel %vm886, %v924, 0
        %931 = vmatpush.msra.mxu0 0.0
        %932 = vmatpush.msra.mxu0 0.0
        %933 = vmatpush.msra.mxu0 0.0
        %934 = vmatpush.msra.mxu0 0.0
        %935 = vmatpush.msra.mxu0 0.0
        %936 = vmatpush.msra.mxu0 0.0
        %937 = vmatpush.msra.mxu0 0.0
        %938 = vmatpush.msra.mxu0 0.0
        %939 = vmatpush.msra.mxu0 0.0
        %940 = vmatpush.msra.mxu0 0.0
        %941 = vmatpush.msra.mxu0 0.0
        %942 = vmatpush.msra.mxu0 0.0
        %943 = vmatpush.msra.mxu0 0.0
        %944 = vmatpush.msra.mxu0 0.0
        %945 = vmatpush.msra.mxu0 0.0
        %946 = vmatpush.msra.mxu0 %v926
        %947 = vmatmul.f32.gmra.mxu0 %v929
        %v948 = vpop.f32.mrf.mxu0
        %v949 = vadd.f32 0.0, %v948
        %950 = vdwg.mxu0
        %951 = vst.msk [vmem:[#allocation3] sm:$0xff] %vm886, %v949
        %952 = vrot.lane.b32.xlu0 %v882, 120
        %v953 = vpop.permute.xlu0 %952
        %954 = vrot.lane.b32.xlu0 %v880, 88
        %v955 = vpop.permute.xlu0 %954
        %v956 = vsel %vm886, %v953, 0
        %v958 = vsel %vm886, %v955, 0
        %960 = vmatpush.xpose.msra.mxu0 0.0
        %961 = vmatpush.xpose.msra.mxu0 0.0
        %962 = vmatpush.xpose.msra.mxu0 0.0
        %963 = vmatpush.xpose.msra.mxu0 0.0
        %964 = vmatpush.xpose.msra.mxu0 0.0
        %965 = vmatpush.xpose.msra.mxu0 0.0
        %966 = vmatpush.xpose.msra.mxu0 0.0
        %967 = vmatpush.xpose.msra.mxu0 0.0
        %968 = vmatpush.xpose.msra.mxu0 0.0
        %969 = vmatpush.xpose.msra.mxu0 0.0
        %970 = vmatpush.xpose.msra.mxu0 0.0
        %971 = vmatpush.xpose.msra.mxu0 0.0
        %972 = vmatpush.xpose.msra.mxu0 0.0
        %973 = vmatpush.xpose.msra.mxu0 0.0
        %974 = vmatpush.xpose.msra.mxu0 0.0
        %975 = vmatpush.xpose.msra.mxu0 %v958
        %976 = vmatmul.f32.gmra.mxu0 %v956
        %v977 = vpop.f32.mrf.mxu0
        %v978 = vadd.f32 0.0, %v977
        %979 = vdwg.mxu0
        %v980 = vsel %vm847, %v978, -1e+09
        %v981 = vsel %vm886, %v980, -inf
        %982 = vmax.xlane.f32.xlu0 %v981
        %v983 = vpop.xlane.xlu0 %982
        %v984 = vsub.f32 %v980, %v983
        %v985 = vmul.f32 %v984, 1.442695
        %v986 = vpow.pop %v985
        %v987 = vsel %vm886, %v986, 0.0
        %988 = vadd.xlane.f32.xlu0 %v987
        %v989 = vpop.xlane.xlu0 %988
        %v990 = vrcp.pop %v989
        %v991 = vmul.f32 %v986, %v990
        %v992 = vsel %vm847, %v991, 0.0
        %993 = vrot.lane.b32.xlu0 %v880, 56
        %v994 = vpop.permute.xlu0 %993
        %v997 = vsel %vm886, %v992, 0
        %999 = vmatpush.msra.mxu0 0.0
        %1000 = vmatpush.msra.mxu0 0.0
        %1001 = vmatpush.msra.mxu0 0.0
        %1002 = vmatpush.msra.mxu0 0.0
        %1003 = vmatpush.msra.mxu0 0.0
        %1004 = vmatpush.msra.mxu0 0.0
        %1005 = vmatpush.msra.mxu0 0.0
        %1006 = vmatpush.msra.mxu0 0.0
        %1007 = vmatpush.msra.mxu0 0.0
        %1008 = vmatpush.msra.mxu0 0.0
        %1009 = vmatpush.msra.mxu0 0.0
        %1010 = vmatpush.msra.mxu0 0.0
        %1011 = vmatpush.msra.mxu0 0.0
        %1012 = vmatpush.msra.mxu0 0.0
        %1013 = vmatpush.msra.mxu0 0.0
        %1014 = vmatpush.msra.mxu0 %v994
        %1015 = vmatmul.f32.gmra.mxu0 %v997
        %v1016 = vpop.f32.mrf.mxu0
        %v1017 = vadd.f32 0.0, %v1016
        %1018 = vdwg.mxu0
        %1020 = vrot.lane.b32.xlu0 %v1017, 8
        %v1021 = vpop.permute.xlu0 %1020
        %vm1023 = vcmask 130112
        %1024 = vst.msk [vmem:[#allocation3] sm:$0xff] %vm1023, %v1021
        %1025 = vrot.lane.b32.xlu0 %v882, 112
        %v1026 = vpop.permute.xlu0 %1025
        %1027 = vrot.lane.b32.xlu0 %v880, 80
        %v1028 = vpop.permute.xlu0 %1027
        %v1029 = vsel %vm886, %v1026, 0
        %v1031 = vsel %vm886, %v1028, 0
        %1033 = vmatpush.xpose.msra.mxu0 0.0
        %1034 = vmatpush.xpose.msra.mxu0 0.0
        %1035 = vmatpush.xpose.msra.mxu0 0.0
        %1036 = vmatpush.xpose.msra.mxu0 0.0
        %1037 = vmatpush.xpose.msra.mxu0 0.0
        %1038 = vmatpush.xpose.msra.mxu0 0.0
        %1039 = vmatpush.xpose.msra.mxu0 0.0
        %1040 = vmatpush.xpose.msra.mxu0 0.0
        %1041 = vmatpush.xpose.msra.mxu0 0.0
        %1042 = vmatpush.xpose.msra.mxu0 0.0
        %1043 = vmatpush.xpose.msra.mxu0 0.0
        %1044 = vmatpush.xpose.msra.mxu0 0.0
        %1045 = vmatpush.xpose.msra.mxu0 0.0
        %1046 = vmatpush.xpose.msra.mxu0 0.0
        %1047 = vmatpush.xpose.msra.mxu0 0.0
        %1048 = vmatpush.xpose.msra.mxu0 %v1031
        %1049 = vmatmul.f32.gmra.mxu0 %v1029
        %v1050 = vpop.f32.mrf.mxu0
        %v1051 = vadd.f32 0.0, %v1050
        %1052 = vdwg.mxu0
        %v1053 = vsel %vm847, %v1051, -1e+09
        %v1054 = vsel %vm886, %v1053, -inf
        %1055 = vmax.xlane.f32.xlu0 %v1054
        %v1056 = vpop.xlane.xlu0 %1055
        %v1057 = vsub.f32 %v1053, %v1056
        %v1058 = vmul.f32 %v1057, 1.442695
        %v1059 = vpow.pop %v1058
        %v1060 = vsel %vm886, %v1059, 0.0
        %1061 = vadd.xlane.f32.xlu0 %v1060
        %v1062 = vpop.xlane.xlu0 %1061
        %v1063 = vrcp.pop %v1062
        %v1064 = vmul.f32 %v1059, %v1063
        %v1065 = vsel %vm847, %v1064, 0.0
        %1066 = vrot.lane.b32.xlu0 %v880, 48
        %v1067 = vpop.permute.xlu0 %1066
        %v1070 = vsel %vm886, %v1065, 0
        %1072 = vmatpush.msra.mxu0 0.0
        %1073 = vmatpush.msra.mxu0 0.0
        %1074 = vmatpush.msra.mxu0 0.0
        %1075 = vmatpush.msra.mxu0 0.0
        %1076 = vmatpush.msra.mxu0 0.0
        %1077 = vmatpush.msra.mxu0 0.0
        %1078 = vmatpush.msra.mxu0 0.0
        %1079 = vmatpush.msra.mxu0 0.0
        %1080 = vmatpush.msra.mxu0 0.0
        %1081 = vmatpush.msra.mxu0 0.0
        %1082 = vmatpush.msra.mxu0 0.0
        %1083 = vmatpush.msra.mxu0 0.0
        %1084 = vmatpush.msra.mxu0 0.0
        %1085 = vmatpush.msra.mxu0 0.0
        %1086 = vmatpush.msra.mxu0 0.0
        %1087 = vmatpush.msra.mxu0 %v1067
        %1088 = vmatmul.f32.gmra.mxu0 %v1070
        %v1089 = vpop.f32.mrf.mxu0
        %v1090 = vadd.f32 0.0, %v1089
        %1091 = vdwg.mxu0
        %1093 = vrot.lane.b32.xlu0 %v1090, 16
        %v1094 = vpop.permute.xlu0 %1093
        %vm1096 = vcmask 195712
        %1097 = vst.msk [vmem:[#allocation3] sm:$0xff] %vm1096, %v1094
        %1098 = vrot.lane.b32.xlu0 %v882, 104
        %v1099 = vpop.permute.xlu0 %1098
        %1100 = vrot.lane.b32.xlu0 %v880, 72
        %v1101 = vpop.permute.xlu0 %1100
        %v1102 = vsel %vm886, %v1099, 0
        %v1104 = vsel %vm886, %v1101, 0
        %1106 = vmatpush.xpose.msra.mxu0 0.0
        %1107 = vmatpush.xpose.msra.mxu0 0.0
        %1108 = vmatpush.xpose.msra.mxu0 0.0
        %1109 = vmatpush.xpose.msra.mxu0 0.0
        %1110 = vmatpush.xpose.msra.mxu0 0.0
        %1111 = vmatpush.xpose.msra.mxu0 0.0
        %1112 = vmatpush.xpose.msra.mxu0 0.0
        %1113 = vmatpush.xpose.msra.mxu0 0.0
        %1114 = vmatpush.xpose.msra.mxu0 0.0
        %1115 = vmatpush.xpose.msra.mxu0 0.0
        %1116 = vmatpush.xpose.msra.mxu0 0.0
        %1117 = vmatpush.xpose.msra.mxu0 0.0
        %1118 = vmatpush.xpose.msra.mxu0 0.0
        %1119 = vmatpush.xpose.msra.mxu0 0.0
        %1120 = vmatpush.xpose.msra.mxu0 0.0
        %1121 = vmatpush.xpose.msra.mxu0 %v1104
        %1122 = vmatmul.f32.gmra.mxu0 %v1102
        %v1123 = vpop.f32.mrf.mxu0
        %v1124 = vadd.f32 0.0, %v1123
        %1125 = vdwg.mxu0
        %v1126 = vsel %vm847, %v1124, -1e+09
        %v1127 = vsel %vm886, %v1126, -inf
        %1128 = vmax.xlane.f32.xlu0 %v1127
        %v1129 = vpop.xlane.xlu0 %1128
        %v1130 = vsub.f32 %v1126, %v1129
        %v1131 = vmul.f32 %v1130, 1.442695
        %v1132 = vpow.pop %v1131
        %v1133 = vsel %vm886, %v1132, 0.0
        %1134 = vadd.xlane.f32.xlu0 %v1133
        %v1135 = vpop.xlane.xlu0 %1134
        %v1136 = vrcp.pop %v1135
        %v1137 = vmul.f32 %v1132, %v1136
        %v1138 = vsel %vm847, %v1137, 0.0
        %1139 = vrot.lane.b32.xlu0 %v880, 40
        %v1140 = vpop.permute.xlu0 %1139
        %v1143 = vsel %vm886, %v1138, 0
        %1145 = vmatpush.msra.mxu0 0.0
        %1146 = vmatpush.msra.mxu0 0.0
        %1147 = vmatpush.msra.mxu0 0.0
        %1148 = vmatpush.msra.mxu0 0.0
        %1149 = vmatpush.msra.mxu0 0.0
        %1150 = vmatpush.msra.mxu0 0.0
        %1151 = vmatpush.msra.mxu0 0.0
        %1152 = vmatpush.msra.mxu0 0.0
        %1153 = vmatpush.msra.mxu0 0.0
        %1154 = vmatpush.msra.mxu0 0.0
        %1155 = vmatpush.msra.mxu0 0.0
        %1156 = vmatpush.msra.mxu0 0.0
        %1157 = vmatpush.msra.mxu0 0.0
        %1158 = vmatpush.msra.mxu0 0.0
        %1159 = vmatpush.msra.mxu0 0.0
        %1160 = vmatpush.msra.mxu0 %v1140
        %1161 = vmatmul.f32.gmra.mxu0 %v1143
        %v1162 = vpop.f32.mrf.mxu0
        %v1163 = vadd.f32 0.0, %v1162
        %1164 = vdwg.mxu0
        %1166 = vrot.lane.b32.xlu0 %v1163, 24
        %v1167 = vpop.permute.xlu0 %1166
        %vm1169 = vcmask 261312
        %1170 = vst.msk [vmem:[#allocation3] sm:$0xff] %vm1169, %v1167
        %v1171 = vld [vmem:[#allocation3] sm:$0xff]
        %v1172 = vld [vmem:[%s680] sm:$0xff]
        %v1173 = vld [vmem:[%s680 + $0x8] sm:$0xff]
        %v1174 = vld [vmem:[%s680 + $0x10] sm:$0xff]
        %v1175 = vld [vmem:[%s680 + $0x18] sm:$0xff]
        %v1176 = vld [vmem:[%s794] sm:$0x1]
        %v1178 = vperm.slane %v1176, 0
        %v1181 = vsel %vm858, %v1171, 0
        %1183 = vmatpush.msra.mxu0 0.0
        %1184 = vmatpush.msra.mxu0 0.0
        %1185 = vmatpush.msra.mxu0 0.0
        %1186 = vmatpush.msra.mxu0 0.0
        %1187 = vmatpush.msra.mxu0 0.0
        %1188 = vmatpush.msra.mxu0 0.0
        %1189 = vmatpush.msra.mxu0 0.0
        %1190 = vmatpush.msra.mxu0 0.0
        %1191 = vmatpush.msra.mxu0 0.0
        %1192 = vmatpush.msra.mxu0 0.0
        %1193 = vmatpush.msra.mxu0 0.0
        %1194 = vmatpush.msra.mxu0 0.0
        %1195 = vmatpush.msra.mxu0 %v1175
        %1196 = vmatpush.msra.mxu0 %v1174
        %1197 = vmatpush.msra.mxu0 %v1173
        %1198 = vmatpush.msra.mxu0 %v1172
        %1199 = vmatmul.f32.gmra.mxu0 %v1181
        %v1200 = vpop.f32.mrf.mxu0
        %v1201 = vadd.f32 %v1178, %v1200
        %1202 = vdwg.mxu0
        %v1203 = vsel %vm858, %v1201, 0.0
        %1204 = vadd.xlane.f32.xlu0 %v1203
        %v1205 = vpop.xlane.xlu0 %1204
        %v1206 = vrcp.pop 32.0
        %v1207 = vmul.f32 32.0, %v1206
        %v1208 = vsub.f32 1.0, %v1207
        %v1209 = vmul.f32 %v1206, %v1208
        %v1210 = vadd.f32 %v1206, %v1209
        %vm1211 = vweird.f32 %v1206
        %v1212 = vsel %vm1211, %v1206, %v1210
        %v1213 = vmul.f32 %v1205, %v1212
        %v1214 = vsub.f32 %v1201, %v1213
        %v1215 = vmul.f32 %v1214, %v1214
        %v1216 = vsel %vm858, %v1215, 0.0
        %1217 = vadd.xlane.f32.xlu0 %v1216
        %v1218 = vpop.xlane.xlu0 %1217
        %v1219 = vrcp.pop 31.0
        %v1220 = vmul.f32 31.0, %v1219
        %v1221 = vsub.f32 1.0, %v1220
        %v1222 = vmul.f32 %v1219, %v1221
        %v1223 = vadd.f32 %v1219, %v1222
        %vm1224 = vweird.f32 %v1219
        %v1225 = vsel %vm1224, %v1219, %v1223
        %v1226 = vmul.f32 %v1218, %v1225
        %v1227 = vrsqrt.pop %v1226
        %v1228 = vmul.f32 %v1227, %v1226
        %v1229 = vmul.f32 %v1228, %v1227
        %v1230 = vmul.f32 0.5, %v1229
        %v1231 = vsub.f32 1.5, %v1230
        %v1232 = vmul.f32 %v1227, %v1231
        %v1233 = vmul.f32 %v1226, %v1232
        %vm1234 = vcmp.eq.f32.partialorder %v1226, inf
        %v1235 = vsel %vm1234, %v1226, %v1233
        %vm1236 = vcmp.eq.f32.partialorder %v1226, 0.0
        %v1237 = vand.u32 %v1226, 2147483648
        %v1238 = vsel %vm1236, %v1237, %v1235
        %v1240 = vperm.slane %v848, 0
        %v1242 = vmul.f32 %v1240, %v1214
        %v1243 = vadd.f32 %v1238, 1e-06
        %v1244 = vrcp.pop %v1243
        %v1245 = vmul.f32 %v1243, %v1244
        %v1246 = vsub.f32 1.0, %v1245
        %v1247 = vmul.f32 %v1244, %v1246
        %v1248 = vadd.f32 %v1244, %v1247
        %vm1249 = vweird.f32 %v1243
        %vm1250 = vweird.f32 %v1244
        %vm1251 = vmor %vm1249, %vm1250
        %v1252 = vsel %vm1251, %v1244, %v1248
        %v1253 = vand.u32 2147483647, %v1243
        %vm1254 = vcmp.eq.f32.partialorder %v1253, 8.507059e+37
        %v1255 = vand.u32 %v1243, 2147483648
        %v1256 = vor.u32 1.1754944e-38, %v1255
        %v1257 = vsel %vm1254, %v1256, %v1252
        %v1258 = vmul.f32 %v1242, %v1257
        %v1260 = vperm.slane %v849, 0
        %v1262 = vadd.f32 %v1258, %v1260
        %v1263 = vadd.f32 %v844, %v1262
        %v1264 = vld [vmem:[%s690] sm:$0xff]
        %v1265 = vld [vmem:[%s690 + $0x8] sm:$0xff]
        %v1266 = vld [vmem:[%s690 + $0x10] sm:$0xff]
        %v1267 = vld [vmem:[%s690 + $0x18] sm:$0xff]
        %v1268 = vld [vmem:[%s797] sm:$0x1]
        %v1270 = vperm.slane %v1268, 0
        %v1273 = vsel %vm858, %v1263, 0
        %1275 = vmatpush.msra.mxu0 0.0
        %1276 = vmatpush.msra.mxu0 0.0
        %1277 = vmatpush.msra.mxu0 0.0
        %1278 = vmatpush.msra.mxu0 0.0
        %1279 = vmatpush.msra.mxu0 0.0
        %1280 = vmatpush.msra.mxu0 0.0
        %1281 = vmatpush.msra.mxu0 0.0
        %1282 = vmatpush.msra.mxu0 0.0
        %1283 = vmatpush.msra.mxu0 0.0
        %1284 = vmatpush.msra.mxu0 0.0
        %1285 = vmatpush.msra.mxu0 0.0
        %1286 = vmatpush.msra.mxu0 0.0
        %1287 = vmatpush.msra.mxu0 %v1267
        %1288 = vmatpush.msra.mxu0 %v1266
        %1289 = vmatpush.msra.mxu0 %v1265
        %1290 = vmatpush.msra.mxu0 %v1264
        %1291 = vmatmul.f32.gmra.mxu0 %v1273
        %v1292 = vpop.f32.mrf.mxu0
        %v1293 = vadd.f32 %v1270, %v1292
        %1294 = vdwg.mxu0
        %v1295 = vld [vmem:[%s700] sm:$0xff]
        %v1296 = vld [vmem:[%s700 + $0x8] sm:$0xff]
        %v1297 = vld [vmem:[%s700 + $0x10] sm:$0xff]
        %v1298 = vld [vmem:[%s700 + $0x18] sm:$0xff]
        %v1299 = vld [vmem:[%s800] sm:$0x1]
        %v1301 = vperm.slane %v1299, 0
        %v1304 = vsel %vm858, %v1293, 0
        %1306 = vmatpush.msra.mxu0 0.0
        %1307 = vmatpush.msra.mxu0 0.0
        %1308 = vmatpush.msra.mxu0 0.0
        %1309 = vmatpush.msra.mxu0 0.0
        %1310 = vmatpush.msra.mxu0 0.0
        %1311 = vmatpush.msra.mxu0 0.0
        %1312 = vmatpush.msra.mxu0 0.0
        %1313 = vmatpush.msra.mxu0 0.0
        %1314 = vmatpush.msra.mxu0 0.0
        %1315 = vmatpush.msra.mxu0 0.0
        %1316 = vmatpush.msra.mxu0 0.0
        %1317 = vmatpush.msra.mxu0 0.0
        %1318 = vmatpush.msra.mxu0 %v1298
        %1319 = vmatpush.msra.mxu0 %v1297
        %1320 = vmatpush.msra.mxu0 %v1296
        %1321 = vmatpush.msra.mxu0 %v1295
        %1322 = vmatmul.f32.gmra.mxu0 %v1304
        %v1323 = vpop.f32.mrf.mxu0
        %v1324 = vadd.f32 %v1301, %v1323
        %1325 = vdwg.mxu0
        %v1326 = vsel %vm858, %v1324, 0.0
        %1327 = vadd.xlane.f32.xlu0 %v1326
        %v1328 = vpop.xlane.xlu0 %1327
        %v1329 = vmul.f32 %v1328, %v1212
        %v1330 = vsub.f32 %v1324, %v1329
        %v1331 = vmul.f32 %v1330, %v1330
        %v1332 = vsel %vm858, %v1331, 0.0
        %1333 = vadd.xlane.f32.xlu0 %v1332
        %v1334 = vpop.xlane.xlu0 %1333
        %v1335 = vmul.f32 %v1334, %v1225
        %v1336 = vrsqrt.pop %v1335
        %v1337 = vmul.f32 %v1336, %v1335
        %v1338 = vmul.f32 %v1337, %v1336
        %v1339 = vmul.f32 0.5, %v1338
        %v1340 = vsub.f32 1.5, %v1339
        %v1341 = vmul.f32 %v1336, %v1340
        %v1342 = vmul.f32 %v1335, %v1341
        %vm1343 = vcmp.eq.f32.partialorder %v1335, inf
        %v1344 = vsel %vm1343, %v1335, %v1342
        %vm1345 = vcmp.eq.f32.partialorder %v1335, 0.0
        %v1346 = vand.u32 %v1335, 2147483648
        %v1347 = vsel %vm1345, %v1346, %v1344
        %v1348 = vmul.f32 %v1240, %v1330
        %v1349 = vadd.f32 %v1347, 1e-06
        %v1350 = vrcp.pop %v1349
        %v1351 = vmul.f32 %v1349, %v1350
        %v1352 = vsub.f32 1.0, %v1351
        %v1353 = vmul.f32 %v1350, %v1352
        %v1354 = vadd.f32 %v1350, %v1353
        %vm1355 = vweird.f32 %v1349
        %vm1356 = vweird.f32 %v1350
        %vm1357 = vmor %vm1355, %vm1356
        %v1358 = vsel %vm1357, %v1350, %v1354
        %v1359 = vand.u32 2147483647, %v1349
        %vm1360 = vcmp.eq.f32.partialorder %v1359, 8.507059e+37
        %v1361 = vand.u32 %v1349, 2147483648
        %v1362 = vor.u32 1.1754944e-38, %v1361
        %v1363 = vsel %vm1360, %v1362, %v1358
        %v1364 = vmul.f32 %v1348, %v1363
        %v1365 = vadd.f32 %v1364, %v1260
        %v1366 = vadd.f32 %v1263, %v1365
        %v1367 = vsel %vm858, %v1366, 0.0
        %1368 = vadd.xlane.f32.xlu0 %v1367
        %v1369 = vpop.xlane.xlu0 %1368
        %v1370 = vmul.f32 %v1369, %v1212
        %v1371 = vsub.f32 %v1366, %v1370
        %v1372 = vmul.f32 %v1371, %v1371
        %v1373 = vsel %vm858, %v1372, 0.0
        %1374 = vadd.xlane.f32.xlu0 %v1373
        %v1375 = vpop.xlane.xlu0 %1374
        %v1376 = vmul.f32 %v1375, %v1225
        %v1377 = vrsqrt.pop %v1376
        %v1378 = vmul.f32 %v1377, %v1376
        %v1379 = vmul.f32 %v1378, %v1377
        %v1380 = vmul.f32 0.5, %v1379
        %v1381 = vsub.f32 1.5, %v1380
        %v1382 = vmul.f32 %v1377, %v1381
        %v1383 = vmul.f32 %v1376, %v1382
        %vm1384 = vcmp.eq.f32.partialorder %v1376, inf
        %v1385 = vsel %vm1384, %v1376, %v1383
        %vm1386 = vcmp.eq.f32.partialorder %v1376, 0.0
        %v1387 = vand.u32 %v1376, 2147483648
        %v1388 = vsel %vm1386, %v1387, %v1385
        %v1389 = vmul.f32 %v1240, %v1371
        %v1390 = vadd.f32 %v1388, 1e-06
        %v1391 = vrcp.pop %v1390
        %v1392 = vmul.f32 %v1390, %v1391
        %v1393 = vsub.f32 1.0, %v1392
        %v1394 = vmul.f32 %v1391, %v1393
        %v1395 = vadd.f32 %v1391, %v1394
        %vm1396 = vweird.f32 %v1390
        %vm1397 = vweird.f32 %v1391
        %vm1398 = vmor %vm1396, %vm1397
        %v1399 = vsel %vm1398, %v1391, %v1395
        %v1400 = vand.u32 2147483647, %v1390
        %vm1401 = vcmp.eq.f32.partialorder %v1400, 8.507059e+37
        %v1402 = vand.u32 %v1390, 2147483648
        %v1403 = vor.u32 1.1754944e-38, %v1402
        %v1404 = vsel %vm1401, %v1403, %v1399
        %v1405 = vmul.f32 %v1389, %v1404
        %v1406 = vadd.f32 %v1405, %v1260
        %1407 = vst.msk [vmem:[#allocation2] sm:$0xff] %vm858, %v1406
        %p1408 = scmp.eq.s32.totalorder %s40, 1
        // Predicated region
        $region113: #{tpu_custom_call.1} parent=75 // pred_check
          %p1409 = pneg %p1408
        $region114: #{tpu_custom_call.1} parent=75 // pred_check_branch
          %1411 = sbr.rel (%p1409) target = $region116
        $region115: #{tpu_custom_call.1} parent=75 // pred_region
          %1412 = vst.msk [vmem:[%s788] sm:$0xff] %vm858, %v1406
        $region116: #{tpu_custom_call.1} parent=75 // pred_fallthru
          _
        %s1413 = sand.u32 %s409, 1
        %s1414 = scalar_lea.sflag [#allocation6], %s1413
        %s1415 = sand.u32 %s409, 1
        %s1416 = smul.addr %s1415, 8
        %s1417 = scalar_lea.vmem [#allocation16], %s1416
        // Predicated region
        $region117: #{tpu_custom_call.1} parent=75 // pred_check
          %p1418 = pneg %p419
        $region118: #{tpu_custom_call.1} parent=75 // pred_check_branch
          %1420 = sbr.rel (%p1418) target = $region120
        $region119: #{tpu_custom_call.1} parent=75 // pred_region
          %1422 = vsyncadd %s1414, 0
          %s1423 = smul.addr %s39, 8
          %s1424 = scalar_lea.hbm %s14, %s1423
          %s1426 = sshll.u32 %s1417, 4
          %s1427 = int_to_ptr.vmem [resolvable:$true] %s1426
          %s1428 = sshll.u32 %s1424, 4
          %s1429 = int_to_ptr.hbm [resolvable:$true] %s1428
          %1431 = dma.vmem_to_hbm [thread:$0]  %s1427, 128, %s1429, %s1414
        $region120: #{tpu_custom_call.1} parent=75 // pred_fallthru
          _
      $region76: #{tpu_custom_call.1} parent=5 // pred_fallthru
        _
      %p1432 = scmp.le.s32.totalorder 2, %s30
      // Predicated region
      $region121: #{tpu_custom_call.1} parent=5 // pred_check
        %p1433 = pneg %p1432
      $region122: #{tpu_custom_call.1} parent=5 // pred_check_branch
        %1435 = sbr.rel (%p1433) target = $region124
      $region123: #{tpu_custom_call.1} parent=5 // pred_region
        %s1436 = ssub.s32 %s30, 2
        // Predicated region
        $region125: #{tpu_custom_call.1} parent=123 // pred_check
          %p1437 = pneg %p425
        $region126: #{tpu_custom_call.1} parent=123 // pred_check_branch
          %1439 = sbr.rel (%p1437) target = $region128
        $region127: #{tpu_custom_call.1} parent=123 // pred_region
          %s1440 = sand.u32 %s410, 1
          %s1441 = scalar_lea.sflag [#allocation6], %s1440
          %s1442 = sand.u32 %s410, 1
          %s1443 = smul.addr %s1442, 8
          %s1444 = scalar_lea.vmem [#allocation16], %s1443
          %1446 = dma.done %s1441, 128
        $region128: #{tpu_custom_call.1} parent=123 // pred_fallthru
          _
      $region124: #{tpu_custom_call.1} parent=5 // pred_fallthru
        _
    $region6: #{tpu_custom_call.1} parent=1 // loop_footer
      %s34 = sadd.s32 1, %s30
    $region7: #{tpu_custom_call.1} parent=1 // loop_footer_branch
      %29 = sbr.rel target = $region3
    $region8: #{tpu_custom_call.1} parent=1 // loop_exit
      _
    %1447 = vsyncpa [#allocation5], 1
    %s1448 = scalar_lea.sflag [#allocation5], 1
    %1449 = vsyncpa %s1448, 1
    %1450 = vsyncpa [#allocation8], 1
    %s1451 = scalar_lea.sflag [#allocation8], 1
    %1452 = vsyncpa %s1451, 1
    %1453 = vsyncpa [#allocation11], 1
    %1454 = vsyncpa [#allocation6], 1
    %s1455 = scalar_lea.sflag [#allocation6], 1
    %1456 = vsyncpa %s1455, 1

</llo_original>
